<compile_context>
chip_gen: v7x
topology: tpu7x:2x2x1
jax: 0.10.0
libtpu: 0.0.40
codegen_flags: <defaults>
</compile_context>

<pallas_src>
import functools

import jax
import jax.numpy as jnp
import numpy as np
from jax.experimental import pallas as pl
from jax.experimental.pallas import tpu as pltpu

_SELU_SCALE = 1.0507009873554805
_SELU_ALPHA = 1.6732632423543772
_NACC = 4  # independent conv accumulators (break the serialized FMA chain)


def _selu(x):
    return _SELU_SCALE * jnp.where(x > 0, x, _SELU_ALPHA * (jnp.exp(x) - 1.0))


def _sigmoid(x, approx):
    # exp and the (optionally approximate) reciprocal both ride the EUP slot.
    return pl.reciprocal(1.0 + jnp.exp(-x), approx=approx)


def _cbam_kernel(x_ref, w1t_ref, w2_ref, wtaps_ref, o_ref, *,
                 H, W, C, k, bt, approx_recip):
    """One batch-block.  Layout: (bt, C, H*W) with H*W on the lane axis."""
    pad = k // 2
    HW = H * W
    s_row = pad * W            # flat-index padding needed for row shifts
    s_all = s_row + pad        # total zero padding on each side of the flat map
    L = HW + 2 * s_row         # length of the per-dj column-shifted buffer

    x = x_ref[...]                                            # (bt, C, HW) native dtype

    # ---------------- channel attention ----------------
    # Global max / avg pool over H*W: lane reductions, f32 accumulation;
    # keepdims keeps per-channel values on the sublane axis (no relayout later).
    max_p = jnp.max(x, axis=-1, keepdims=True).astype(jnp.float32)      # (bt, C, 1)
    avg_p = (jnp.sum(x, axis=-1, keepdims=True, dtype=jnp.float32)
             * (1.0 / HW))                                              # (bt, C, 1)
    pooled = jnp.concatenate([max_p, avg_p], axis=0)                    # (2bt, C, 1)

    # Shared MLP (two 1x1 convs) as VPU broadcast-multiply + reduce (tiny).
    w1t = w1t_ref[...][None]                                  # (1, C, hid)
    h = jnp.sum(pooled * w1t, axis=1, keepdims=True)          # (2bt, 1, hid)
    h = _selu(h)
    w2 = w2_ref[...][None]                                    # (1, C, hid)
    m = jnp.sum(h * w2, axis=-1, keepdims=True)               # (2bt, C, 1)

    ch_att = _sigmoid(m[:bt] + m[bt:], approx_recip)          # (bt, C, 1) f32
    # Keep the dominant elementwise pass in the I/O dtype (bf16 packs on v6e+).
    xc = x * ch_att.astype(x.dtype)                           # (bt, C, HW)

    # ---------------- spatial attention ----------------
    # Channel max / mean: sublane (XLU) reductions.  Pack the max- and avg-maps
    # of the whole batch block onto the sublane axis so the 7x7-conv hot loop
    # runs on full 8-sublane vregs instead of 1-of-8.
    # TODO(synk): if profiling shows the 2-unit XLU binding on v6e/v7x, pre-fold
    # these reductions pairwise on the VPU before the final XLU reduce.
    max_c = jnp.max(xc, axis=1).astype(jnp.float32)                     # (bt, HW)
    avg_c = jnp.sum(xc, axis=1, dtype=jnp.float32) * (1.0 / C)          # (bt, HW)
    maps = jnp.concatenate([max_c, avg_c], axis=0)                      # (2bt, HW)

    # Zero-pad the flattened maps so every conv tap is a static lane slice and
    # row validity is handled for free by the padding.
    zpad = jnp.zeros((2 * bt, s_all), jnp.float32)
    flat = jnp.concatenate([zpad, maps, zpad], axis=-1)       # (2bt, HW + 2*s_all)

    # Column-validity mask depends only on dj (hoisted out of the tap loop).
    col_of = jax.lax.broadcasted_iota(jnp.int32, (1, L), 1) % W

    # Per-tap weight columns: rows [0, bt) carry the max-channel tap weight,
    # rows [bt, 2bt) the avg-channel tap weight (built once in the wrapper).
    wt = wtaps_ref[...]                                       # (2bt, k*k) f32

    accs = [jnp.zeros((2 * bt, HW), jnp.float32) for _ in range(_NACC)]
    for dj in range(k):
        oj = dj - pad
        # One lane-shifted slice + one column mask per dj (k total, not k*k).
        col = flat[:, pad + oj: pad + oj + L]                 # (2bt, L)
        if oj != 0:
            cmask = jnp.logical_and(col_of + oj >= 0, col_of + oj < W)
            col = jnp.where(cmask, col, 0.0)
        for di in range(k):
            oi = di - pad
            off = s_row + oi * W
            # TODO(synk): when W % 128 != 0 these static lane slices are
            # unaligned; if the XLU/vld slot binds, pad W to 128 lanes instead.
            sl = col[:, off: off + HW]                        # (2bt, HW)
            t = di * k + dj
            a = t % _NACC
            accs[a] = accs[a] + wt[:, t: t + 1] * sl          # per-sublane FMA

    acc = accs[0]
    for a in range(1, _NACC):
        acc = acc + accs[a]                                   # (2bt, HW)
    conv = acc[:bt] + acc[bt:]                                # (bt, HW): max + avg halves

    sp_att = _sigmoid(conv, approx_recip)                     # (bt, HW) f32
    sp_att = sp_att.astype(x.dtype)[:, None, :]               # (bt, 1, HW)
    o_ref[...] = (xc * sp_att).astype(o_ref.dtype)            # lane-dense store


def cbam_forward(x_nchw, w1, w2, wconv, *, spatial_kernel=7):
    """CBAM forward.

    x_nchw: (B, C, H, W)   input; output keeps its dtype (bf16 in -> bf16 out)
    w1:     (C//r, C)      Conv2d(C, C//r, 1, bias=False) weight
    w2:     (C, C//r)      Conv2d(C//r, C, 1, bias=False) weight
    wconv:  (1, 2, k, k)   Conv2d(2, 1, k, padding=k//2, bias=False) weight
    """
    B, C, H, W = x_nchw.shape
    hid = w1.shape[0]
    k = spatial_kernel
    HW = H * W

    # NCHW -> (B, C, H*W): free contiguous reshape, no HBM transpose / cast.
    x_flat = x_nchw.reshape(B, C, HW)

    # ---- generation-aware VMEM budget and batch-block size ----
    try:
        phys_vmem = int(pltpu.get_tpu_info().vmem_capacity_bytes)
    except Exception:
        phys_vmem = 64 << 20          # conservative (v7x-sized) fallback
    cap = int(phys_vmem * 0.85)       # never request more than ~85% of physical

    itemsize = x_flat.dtype.itemsize
    in_elem = C * HW * itemsize
    # Per-batch-element footprint: double-buffered in/out blocks plus the x/xc
    # live copies in native dtype (~8x input bytes), plus the f32 spatial
    # working set (maps, padded flat buffer, per-dj columns, _NACC stacked
    # accumulators, conv/sigmoid temporaries) budgeted at ~32 f32 words/pixel.
    per_elem = 8 * in_elem + 32 * HW * 4 + (1 << 15)
    budget = cap // 2
    bt = max(1, min(B, budget // per_elem))
    if B >= 2:
        bt = min(bt, B // 2)          # keep grid >= 2 so both v7x TCs get work
    while B % bt:
        bt -= 1

    need = bt * per_elem + (2 << 20)
    # Always pass an explicit limit (v5e's scoped default is only 16 MiB),
    # clamped to the generation's physical VMEM (64 MiB on v7x).
    vmem_limit = int(min(cap, max(2 * need, 32 << 20)))

    w1t = jnp.transpose(w1).astype(jnp.float32)            # (C, hid)
    w2f = w2.astype(jnp.float32)                           # (C, hid)
    # Per-sublane conv-tap weight table: rows [0,bt) = max channel taps,
    # rows [bt,2bt) = avg channel taps.
    wconv_f = wconv.astype(jnp.float32)
    wtaps = jnp.concatenate(
        [jnp.broadcast_to(wconv_f[0, 0].reshape(1, k * k), (bt, k * k)),
         jnp.broadcast_to(wconv_f[0, 1].reshape(1, k * k), (bt, k * k))],
        axis=0)                                            # (2bt, k*k)

    approx_recip = itemsize < 4        # EUP approx reciprocal only for sub-f32 I/O

    kernel = functools.partial(_cbam_kernel, H=H, W=W, C=C, k=k, bt=bt,
                               approx_recip=approx_recip)

    out_flat = pl.pallas_call(
        kernel,
        out_shape=jax.ShapeDtypeStruct((B, C, HW), x_flat.dtype),
        grid=(B // bt,),
        in_specs=[
            pl.BlockSpec((bt, C, HW), lambda b: (b, 0, 0)),
            pl.BlockSpec((C, hid), lambda b: (0, 0)),
            pl.BlockSpec((C, hid), lambda b: (0, 0)),
            pl.BlockSpec((2 * bt, k * k), lambda b: (0, 0)),
        ],
        out_specs=pl.BlockSpec((bt, C, HW), lambda b: (b, 0, 0)),
        compiler_params=pltpu.CompilerParams(
            dimension_semantics=("parallel",),
            vmem_limit_bytes=vmem_limit,
        ),
    )(x_flat, w1t, w2f, wtaps)

    return out_flat.reshape(B, C, H, W)


def _reference(x, w1, w2, wconv):
    """Pure-JAX reference mirroring the PyTorch CBAMLayer forward (NCHW)."""
    maxp = jnp.max(x, axis=(2, 3))
    avgp = jnp.mean(x, axis=(2, 3))

    def mlp(p):
        h = jax.nn.selu(p @ w1.T)
        return h @ w2.T

    ch = jax.nn.sigmoid(mlp(maxp) + mlp(avgp))
    xc = x * ch[:, :, None, None]
    mx = jnp.max(xc, axis=1, keepdims=True)
    av = jnp.mean(xc, axis=1, keepdims=True)
    sm = jnp.concatenate([mx, av], axis=1)
    pad = wconv.shape[-1] // 2
    sp = jax.lax.conv_general_dilated(
        sm, wconv, (1, 1), [(pad, pad), (pad, pad)],
        dimension_numbers=("NCHW", "OIHW", "NCHW"))
    return xc * jax.nn.sigmoid(sp)


if __name__ == "__main__":
    # channel=32, reduction=16 -> hidden=2; spatial_kernel=7
    B, C, H, W = 2, 32, 16, 16
    reduction, k = 16, 7
    hid = C // reduction

    key = jax.random.PRNGKey(0)
    kx, k1, k2, kc = jax.random.split(key, 4)
    x = jax.random.normal(kx, (B, C, H, W), jnp.float32)
    w1 = jax.random.normal(k1, (hid, C), jnp.float32) * 0.2         # Conv2d(C, C//r, 1)
    w2 = jax.random.normal(k2, (C, hid), jnp.float32) * 0.2         # Conv2d(C//r, C, 1)
    wconv = jax.random.normal(kc, (1, 2, k, k), jnp.float32) * 0.1  # Conv2d(2, 1, 7)

    out = jax.block_until_ready(cbam_forward(x, w1, w2, wconv, spatial_kernel=k))
    ref = jax.block_until_ready(_reference(x, w1, w2, wconv))

    assert out.shape == (B, C, H, W)
    assert out.dtype == x.dtype
    np.testing.assert_allclose(np.asarray(out), np.asarray(ref), rtol=1e-4, atol=1e-4)
    print("KERNEL_OK")
</pallas_src>

<mosaic_0001>
module attributes {stable_mosaic.version = 11 : i64} {
  func.func @_cbam_kernel(%arg0: i32, %arg1: memref<1x32x256xf32, #tpu.memory_space<vmem>>, %arg2: memref<32x2xf32, #tpu.memory_space<vmem>>, %arg3: memref<32x2xf32, #tpu.memory_space<vmem>>, %arg4: memref<2x49xf32, #tpu.memory_space<vmem>>, %arg5: memref<1x32x256xf32, #tpu.memory_space<vmem>>) attributes {dimension_semantics = [#tpu.dimension_semantics<parallel>], iteration_bounds = array<i64: 2>, scalar_prefetch = 0 : i64, scratch_operands = 0 : i64, tpu.core_type = #tpu.core_type<tc>, window_params = [{transform_indices = @transform_0, window_bounds = array<i64: 1, 32, 256>}, {pipeline_mode = #tpu.pipeline_mode<synchronous>, transform_indices = @transform_1, window_bounds = array<i64: 32, 2>}, {pipeline_mode = #tpu.pipeline_mode<synchronous>, transform_indices = @transform_2, window_bounds = array<i64: 32, 2>}, {pipeline_mode = #tpu.pipeline_mode<synchronous>, transform_indices = @transform_3, window_bounds = array<i64: 2, 49>}, {transform_indices = @transform_4, window_bounds = array<i64: 1, 32, 256>}]} {
    %c0 = arith.constant 0 : index
    %c0_0 = arith.constant 0 : index
    %c0_1 = arith.constant 0 : index
    %0 = vector.load %arg1[%c0, %c0_0, %c0_1] : memref<1x32x256xf32, #tpu.memory_space<vmem>>, vector<1x32x256xf32>
    %cst = arith.constant dense<0xFF800000> : vector<1x32xf32>
    %1 = vector.multi_reduction <maximumf>, %0, %cst [2] : vector<1x32x256xf32> to vector<1x32xf32>
    %2 = vector.shape_cast %1 : vector<1x32xf32> to vector<1x32x1xf32>
    %cst_2 = arith.constant dense<0.000000e+00> : vector<1x32xf32>
    %3 = vector.multi_reduction <add>, %0, %cst_2 [2] : vector<1x32x256xf32> to vector<1x32xf32>
    %4 = vector.shape_cast %3 : vector<1x32xf32> to vector<1x32x1xf32>
    %cst_3 = arith.constant 3.906250e-03 : f32
    %5 = vector.broadcast %cst_3 : f32 to vector<1x32x1xf32>
    %6 = arith.mulf %4, %5 : vector<1x32x1xf32>
    %7 = tpu.concatenate %2, %6 in 0 : vector<1x32x1xf32>, vector<1x32x1xf32> -> vector<2x32x1xf32>
    %c0_4 = arith.constant 0 : index
    %c0_5 = arith.constant 0 : index
    %8 = vector.load %arg2[%c0_4, %c0_5] : memref<32x2xf32, #tpu.memory_space<vmem>>, vector<32x2xf32>
    %9 = vector.shape_cast %8 : vector<32x2xf32> to vector<1x32x2xf32>
    %10 = vector.broadcast %7 : vector<2x32x1xf32> to vector<2x32x2xf32>
    %11 = vector.broadcast %9 : vector<1x32x2xf32> to vector<2x32x2xf32>
    %12 = arith.mulf %10, %11 : vector<2x32x2xf32>
    %cst_6 = arith.constant dense<0.000000e+00> : vector<2x2xf32>
    %13 = vector.multi_reduction <add>, %12, %cst_6 [1] : vector<2x32x2xf32> to vector<2x2xf32>
    %14 = vector.shape_cast %13 : vector<2x2xf32> to vector<2x1x2xf32>
    %cst_7 = arith.constant 0.000000e+00 : f32
    %15 = vector.broadcast %cst_7 : f32 to vector<2x1x2xf32>
    %16 = arith.cmpf ogt, %14, %15 : vector<2x1x2xf32>
    %17 = math.exp %14 : vector<2x1x2xf32>
    %cst_8 = arith.constant 1.000000e+00 : f32
    %18 = vector.broadcast %cst_8 : f32 to vector<2x1x2xf32>
    %19 = arith.subf %17, %18 : vector<2x1x2xf32>
    %cst_9 = arith.constant 1.67326319 : f32
    %20 = vector.broadcast %cst_9 : f32 to vector<2x1x2xf32>
    %21 = arith.mulf %20, %19 : vector<2x1x2xf32>
    %22 = arith.select %16, %14, %21 : vector<2x1x2xi1>, vector<2x1x2xf32>
    %cst_10 = arith.constant 1.05070102 : f32
    %23 = vector.broadcast %cst_10 : f32 to vector<2x1x2xf32>
    %24 = arith.mulf %23, %22 : vector<2x1x2xf32>
    %c0_11 = arith.constant 0 : index
    %c0_12 = arith.constant 0 : index
    %25 = vector.load %arg3[%c0_11, %c0_12] : memref<32x2xf32, #tpu.memory_space<vmem>>, vector<32x2xf32>
    %26 = vector.shape_cast %25 : vector<32x2xf32> to vector<1x32x2xf32>
    %27 = vector.broadcast %24 : vector<2x1x2xf32> to vector<2x32x2xf32>
    %28 = vector.broadcast %26 : vector<1x32x2xf32> to vector<2x32x2xf32>
    %29 = arith.mulf %27, %28 : vector<2x32x2xf32>
    %cst_13 = arith.constant dense<0.000000e+00> : vector<2x32xf32>
    %30 = vector.multi_reduction <add>, %29, %cst_13 [2] : vector<2x32x2xf32> to vector<2x32xf32>
    %31 = vector.shape_cast %30 : vector<2x32xf32> to vector<2x32x1xf32>
    %32 = vector.extract_strided_slice %31 {offsets = [0, 0, 0], sizes = [1, 32, 1], strides = [1, 1, 1]} : vector<2x32x1xf32> to vector<1x32x1xf32>
    %33 = vector.extract_strided_slice %31 {offsets = [1, 0, 0], sizes = [1, 32, 1], strides = [1, 1, 1]} : vector<2x32x1xf32> to vector<1x32x1xf32>
    %34 = arith.addf %32, %33 : vector<1x32x1xf32>
    %cst_14 = arith.constant 0.000000e+00 : f32
    %35 = vector.broadcast %cst_14 : f32 to vector<1x32x1xf32>
    %36 = arith.subf %35, %34 : vector<1x32x1xf32>
    %37 = math.exp %36 : vector<1x32x1xf32>
    %cst_15 = arith.constant 1.000000e+00 : f32
    %38 = vector.broadcast %cst_15 : f32 to vector<1x32x1xf32>
    %39 = arith.addf %38, %37 : vector<1x32x1xf32>
    %40 = tpu.reciprocal %39 : vector<1x32x1xf32> -> vector<1x32x1xf32>
    %41 = vector.broadcast %40 : vector<1x32x1xf32> to vector<1x32x256xf32>
    %42 = arith.mulf %0, %41 : vector<1x32x256xf32>
    %cst_16 = arith.constant dense<0xFF800000> : vector<1x256xf32>
    %43 = vector.multi_reduction <maximumf>, %42, %cst_16 [1] : vector<1x32x256xf32> to vector<1x256xf32>
    %cst_17 = arith.constant dense<0.000000e+00> : vector<1x256xf32>
    %44 = vector.multi_reduction <add>, %42, %cst_17 [1] : vector<1x32x256xf32> to vector<1x256xf32>
    %cst_18 = arith.constant 3.125000e-02 : f32
    %45 = vector.broadcast %cst_18 : f32 to vector<1x256xf32>
    %46 = arith.mulf %44, %45 : vector<1x256xf32>
    %47 = tpu.concatenate %43, %46 in 0 : vector<1x256xf32>, vector<1x256xf32> -> vector<2x256xf32>
    %cst_19 = arith.constant 0.000000e+00 : f32
    %48 = vector.broadcast %cst_19 : f32 to vector<2x51xf32>
    %49 = tpu.concatenate %48, %47, %48 in 1 : vector<2x51xf32>, vector<2x256xf32>, vector<2x51xf32> -> vector<2x358xf32>
    %50 = tpu.iota {dimensions = array<i32: 1>} : vector<1x352xi32>
    %c16_i32 = arith.constant 16 : i32
    %c0_i32 = arith.constant 0 : i32
    %51 = arith.cmpi eq, %c16_i32, %c0_i32 : i32
    %c1_i32 = arith.constant 1 : i32
    %52 = arith.select %51, %c1_i32, %c16_i32 : i32
    %53 = vector.broadcast %52 : i32 to vector<1x352xi32>
    %54 = arith.remsi %50, %53 : vector<1x352xi32>
    %c0_i32_20 = arith.constant 0 : i32
    %55 = vector.broadcast %c0_i32_20 : i32 to vector<1x352xi32>
    %56 = arith.cmpi ne, %54, %55 : vector<1x352xi32>
    %c0_i32_21 = arith.constant 0 : i32
    %57 = vector.broadcast %c0_i32_21 : i32 to vector<1x352xi32>
    %58 = arith.cmpi slt, %54, %57 : vector<1x352xi32>
    %c0_i32_22 = arith.constant 0 : i32
    %59 = arith.cmpi slt, %52, %c0_i32_22 : i32
    %60 = vector.broadcast %59 : i1 to vector<1x352xi1>
    %61 = vector.broadcast %60 : vector<1x352xi1> to vector<1x352xi1>
    %62 = arith.xori %58, %61 : vector<1x352xi1>
    %63 = arith.andi %62, %56 : vector<1x352xi1>
    %64 = vector.broadcast %52 : i32 to vector<1x352xi32>
    %65 = arith.addi %54, %64 : vector<1x352xi32>
    %66 = arith.select %63, %65, %54 : vector<1x352xi1>, vector<1x352xi32>
    %c0_23 = arith.constant 0 : index
    %c0_24 = arith.constant 0 : index
    %67 = vector.load %arg4[%c0_23, %c0_24] : memref<2x49xf32, #tpu.memory_space<vmem>>, vector<2x49xf32>
    %cst_25 = arith.constant 0.000000e+00 : f32
    %68 = vector.broadcast %cst_25 : f32 to vector<2x256xf32>
    %cst_26 = arith.constant 0.000000e+00 : f32
    %69 = vector.broadcast %cst_26 : f32 to vector<2x256xf32>
    %cst_27 = arith.constant 0.000000e+00 : f32
    %70 = vector.broadcast %cst_27 : f32 to vector<2x256xf32>
    %cst_28 = arith.constant 0.000000e+00 : f32
    %71 = vector.broadcast %cst_28 : f32 to vector<2x256xf32>
    %72 = vector.extract_strided_slice %49 {offsets = [0, 0], sizes = [2, 352], strides = [1, 1]} : vector<2x358xf32> to vector<2x352xf32>
    %c-3_i32 = arith.constant -3 : i32
    %73 = vector.broadcast %c-3_i32 : i32 to vector<1x352xi32>
    %74 = arith.addi %66, %73 : vector<1x352xi32>
    %c0_i32_29 = arith.constant 0 : i32
    %75 = vector.broadcast %c0_i32_29 : i32 to vector<1x352xi32>
    %76 = arith.cmpi sge, %74, %75 : vector<1x352xi32>
    %c-3_i32_30 = arith.constant -3 : i32
    %77 = vector.broadcast %c-3_i32_30 : i32 to vector<1x352xi32>
    %78 = arith.addi %66, %77 : vector<1x352xi32>
    %c16_i32_31 = arith.constant 16 : i32
    %79 = vector.broadcast %c16_i32_31 : i32 to vector<1x352xi32>
    %80 = arith.cmpi slt, %78, %79 : vector<1x352xi32>
    %81 = arith.andi %76, %80 : vector<1x352xi1>
    %cst_32 = arith.constant 0.000000e+00 : f32
    %82 = vector.shape_cast %81 : vector<1x352xi1> to vector<1x352xi1>
    %83 = vector.broadcast %82 : vector<1x352xi1> to vector<2x352xi1>
    %84 = vector.broadcast %cst_32 : f32 to vector<2x352xf32>
    %85 = arith.select %83, %72, %84 : vector<2x352xi1>, vector<2x352xf32>
    %86 = vector.extract_strided_slice %85 {offsets = [0, 0], sizes = [2, 256], strides = [1, 1]} : vector<2x352xf32> to vector<2x256xf32>
    %87 = vector.extract_strided_slice %67 {offsets = [0, 0], sizes = [2, 1], strides = [1, 1]} : vector<2x49xf32> to vector<2x1xf32>
    %88 = vector.broadcast %87 : vector<2x1xf32> to vector<2x256xf32>
    %89 = arith.mulf %88, %86 : vector<2x256xf32>
    %90 = arith.addf %68, %89 : vector<2x256xf32>
    %91 = vector.extract_strided_slice %85 {offsets = [0, 16], sizes = [2, 256], strides = [1, 1]} : vector<2x352xf32> to vector<2x256xf32>
    %92 = vector.extract_strided_slice %67 {offsets = [0, 7], sizes = [2, 1], strides = [1, 1]} : vector<2x49xf32> to vector<2x1xf32>
    %93 = vector.broadcast %92 : vector<2x1xf32> to vector<2x256xf32>
    %94 = arith.mulf %93, %91 : vector<2x256xf32>
    %95 = arith.addf %71, %94 : vector<2x256xf32>
    %96 = vector.extract_strided_slice %85 {offsets = [0, 32], sizes = [2, 256], strides = [1, 1]} : vector<2x352xf32> to vector<2x256xf32>
    %97 = vector.extract_strided_slice %67 {offsets = [0, 14], sizes = [2, 1], strides = [1, 1]} : vector<2x49xf32> to vector<2x1xf32>
    %98 = vector.broadcast %97 : vector<2x1xf32> to vector<2x256xf32>
    %99 = arith.mulf %98, %96 : vector<2x256xf32>
    %100 = arith.addf %70, %99 : vector<2x256xf32>
    %101 = vector.extract_strided_slice %85 {offsets = [0, 48], sizes = [2, 256], strides = [1, 1]} : vector<2x352xf32> to vector<2x256xf32>
    %102 = vector.extract_strided_slice %67 {offsets = [0, 21], sizes = [2, 1], strides = [1, 1]} : vector<2x49xf32> to vector<2x1xf32>
    %103 = vector.broadcast %102 : vector<2x1xf32> to vector<2x256xf32>
    %104 = arith.mulf %103, %101 : vector<2x256xf32>
    %105 = arith.addf %69, %104 : vector<2x256xf32>
    %106 = vector.extract_strided_slice %85 {offsets = [0, 64], sizes = [2, 256], strides = [1, 1]} : vector<2x352xf32> to vector<2x256xf32>
    %107 = vector.extract_strided_slice %67 {offsets = [0, 28], sizes = [2, 1], strides = [1, 1]} : vector<2x49xf32> to vector<2x1xf32>
    %108 = vector.broadcast %107 : vector<2x1xf32> to vector<2x256xf32>
    %109 = arith.mulf %108, %106 : vector<2x256xf32>
    %110 = arith.addf %90, %109 : vector<2x256xf32>
    %111 = vector.extract_strided_slice %85 {offsets = [0, 80], sizes = [2, 256], strides = [1, 1]} : vector<2x352xf32> to vector<2x256xf32>
    %112 = vector.extract_strided_slice %67 {offsets = [0, 35], sizes = [2, 1], strides = [1, 1]} : vector<2x49xf32> to vector<2x1xf32>
    %113 = vector.broadcast %112 : vector<2x1xf32> to vector<2x256xf32>
    %114 = arith.mulf %113, %111 : vector<2x256xf32>
    %115 = arith.addf %95, %114 : vector<2x256xf32>
    %116 = vector.extract_strided_slice %85 {offsets = [0, 96], sizes = [2, 256], strides = [1, 1]} : vector<2x352xf32> to vector<2x256xf32>
    %117 = vector.extract_strided_slice %67 {offsets = [0, 42], sizes = [2, 1], strides = [1, 1]} : vector<2x49xf32> to vector<2x1xf32>
    %118 = vector.broadcast %117 : vector<2x1xf32> to vector<2x256xf32>
    %119 = arith.mulf %118, %116 : vector<2x256xf32>
    %120 = arith.addf %100, %119 : vector<2x256xf32>
    %121 = vector.extract_strided_slice %49 {offsets = [0, 1], sizes = [2, 352], strides = [1, 1]} : vector<2x358xf32> to vector<2x352xf32>
    %c-2_i32 = arith.constant -2 : i32
    %122 = vector.broadcast %c-2_i32 : i32 to vector<1x352xi32>
    %123 = arith.addi %66, %122 : vector<1x352xi32>
    %c0_i32_33 = arith.constant 0 : i32
    %124 = vector.broadcast %c0_i32_33 : i32 to vector<1x352xi32>
    %125 = arith.cmpi sge, %123, %124 : vector<1x352xi32>
    %c-2_i32_34 = arith.constant -2 : i32
    %126 = vector.broadcast %c-2_i32_34 : i32 to vector<1x352xi32>
    %127 = arith.addi %66, %126 : vector<1x352xi32>
    %c16_i32_35 = arith.constant 16 : i32
    %128 = vector.broadcast %c16_i32_35 : i32 to vector<1x352xi32>
    %129 = arith.cmpi slt, %127, %128 : vector<1x352xi32>
    %130 = arith.andi %125, %129 : vector<1x352xi1>
    %cst_36 = arith.constant 0.000000e+00 : f32
    %131 = vector.shape_cast %130 : vector<1x352xi1> to vector<1x352xi1>
    %132 = vector.broadcast %131 : vector<1x352xi1> to vector<2x352xi1>
    %133 = vector.broadcast %cst_36 : f32 to vector<2x352xf32>
    %134 = arith.select %132, %121, %133 : vector<2x352xi1>, vector<2x352xf32>
    %135 = vector.extract_strided_slice %134 {offsets = [0, 0], sizes = [2, 256], strides = [1, 1]} : vector<2x352xf32> to vector<2x256xf32>
    %136 = vector.extract_strided_slice %67 {offsets = [0, 1], sizes = [2, 1], strides = [1, 1]} : vector<2x49xf32> to vector<2x1xf32>
    %137 = vector.broadcast %136 : vector<2x1xf32> to vector<2x256xf32>
    %138 = arith.mulf %137, %135 : vector<2x256xf32>
    %139 = arith.addf %105, %138 : vector<2x256xf32>
    %140 = vector.extract_strided_slice %134 {offsets = [0, 16], sizes = [2, 256], strides = [1, 1]} : vector<2x352xf32> to vector<2x256xf32>
    %141 = vector.extract_strided_slice %67 {offsets = [0, 8], sizes = [2, 1], strides = [1, 1]} : vector<2x49xf32> to vector<2x1xf32>
    %142 = vector.broadcast %141 : vector<2x1xf32> to vector<2x256xf32>
    %143 = arith.mulf %142, %140 : vector<2x256xf32>
    %144 = arith.addf %110, %143 : vector<2x256xf32>
    %145 = vector.extract_strided_slice %134 {offsets = [0, 32], sizes = [2, 256], strides = [1, 1]} : vector<2x352xf32> to vector<2x256xf32>
    %146 = vector.extract_strided_slice %67 {offsets = [0, 15], sizes = [2, 1], strides = [1, 1]} : vector<2x49xf32> to vector<2x1xf32>
    %147 = vector.broadcast %146 : vector<2x1xf32> to vector<2x256xf32>
    %148 = arith.mulf %147, %145 : vector<2x256xf32>
    %149 = arith.addf %115, %148 : vector<2x256xf32>
    %150 = vector.extract_strided_slice %134 {offsets = [0, 48], sizes = [2, 256], strides = [1, 1]} : vector<2x352xf32> to vector<2x256xf32>
    %151 = vector.extract_strided_slice %67 {offsets = [0, 22], sizes = [2, 1], strides = [1, 1]} : vector<2x49xf32> to vector<2x1xf32>
    %152 = vector.broadcast %151 : vector<2x1xf32> to vector<2x256xf32>
    %153 = arith.mulf %152, %150 : vector<2x256xf32>
    %154 = arith.addf %120, %153 : vector<2x256xf32>
    %155 = vector.extract_strided_slice %134 {offsets = [0, 64], sizes = [2, 256], strides = [1, 1]} : vector<2x352xf32> to vector<2x256xf32>
    %156 = vector.extract_strided_slice %67 {offsets = [0, 29], sizes = [2, 1], strides = [1, 1]} : vector<2x49xf32> to vector<2x1xf32>
    %157 = vector.broadcast %156 : vector<2x1xf32> to vector<2x256xf32>
    %158 = arith.mulf %157, %155 : vector<2x256xf32>
    %159 = arith.addf %139, %158 : vector<2x256xf32>
    %160 = vector.extract_strided_slice %134 {offsets = [0, 80], sizes = [2, 256], strides = [1, 1]} : vector<2x352xf32> to vector<2x256xf32>
    %161 = vector.extract_strided_slice %67 {offsets = [0, 36], sizes = [2, 1], strides = [1, 1]} : vector<2x49xf32> to vector<2x1xf32>
    %162 = vector.broadcast %161 : vector<2x1xf32> to vector<2x256xf32>
    %163 = arith.mulf %162, %160 : vector<2x256xf32>
    %164 = arith.addf %144, %163 : vector<2x256xf32>
    %165 = vector.extract_strided_slice %134 {offsets = [0, 96], sizes = [2, 256], strides = [1, 1]} : vector<2x352xf32> to vector<2x256xf32>
    %166 = vector.extract_strided_slice %67 {offsets = [0, 43], sizes = [2, 1], strides = [1, 1]} : vector<2x49xf32> to vector<2x1xf32>
    %167 = vector.broadcast %166 : vector<2x1xf32> to vector<2x256xf32>
    %168 = arith.mulf %167, %165 : vector<2x256xf32>
    %169 = arith.addf %149, %168 : vector<2x256xf32>
    %170 = vector.extract_strided_slice %49 {offsets = [0, 2], sizes = [2, 352], strides = [1, 1]} : vector<2x358xf32> to vector<2x352xf32>
    %c-1_i32 = arith.constant -1 : i32
    %171 = vector.broadcast %c-1_i32 : i32 to vector<1x352xi32>
    %172 = arith.addi %66, %171 : vector<1x352xi32>
    %c0_i32_37 = arith.constant 0 : i32
    %173 = vector.broadcast %c0_i32_37 : i32 to vector<1x352xi32>
    %174 = arith.cmpi sge, %172, %173 : vector<1x352xi32>
    %c-1_i32_38 = arith.constant -1 : i32
    %175 = vector.broadcast %c-1_i32_38 : i32 to vector<1x352xi32>
    %176 = arith.addi %66, %175 : vector<1x352xi32>
    %c16_i32_39 = arith.constant 16 : i32
    %177 = vector.broadcast %c16_i32_39 : i32 to vector<1x352xi32>
    %178 = arith.cmpi slt, %176, %177 : vector<1x352xi32>
    %179 = arith.andi %174, %178 : vector<1x352xi1>
    %cst_40 = arith.constant 0.000000e+00 : f32
    %180 = vector.shape_cast %179 : vector<1x352xi1> to vector<1x352xi1>
    %181 = vector.broadcast %180 : vector<1x352xi1> to vector<2x352xi1>
    %182 = vector.broadcast %cst_40 : f32 to vector<2x352xf32>
    %183 = arith.select %181, %170, %182 : vector<2x352xi1>, vector<2x352xf32>
    %184 = vector.extract_strided_slice %183 {offsets = [0, 0], sizes = [2, 256], strides = [1, 1]} : vector<2x352xf32> to vector<2x256xf32>
    %185 = vector.extract_strided_slice %67 {offsets = [0, 2], sizes = [2, 1], strides = [1, 1]} : vector<2x49xf32> to vector<2x1xf32>
    %186 = vector.broadcast %185 : vector<2x1xf32> to vector<2x256xf32>
    %187 = arith.mulf %186, %184 : vector<2x256xf32>
    %188 = arith.addf %154, %187 : vector<2x256xf32>
    %189 = vector.extract_strided_slice %183 {offsets = [0, 16], sizes = [2, 256], strides = [1, 1]} : vector<2x352xf32> to vector<2x256xf32>
    %190 = vector.extract_strided_slice %67 {offsets = [0, 9], sizes = [2, 1], strides = [1, 1]} : vector<2x49xf32> to vector<2x1xf32>
    %191 = vector.broadcast %190 : vector<2x1xf32> to vector<2x256xf32>
    %192 = arith.mulf %191, %189 : vector<2x256xf32>
    %193 = arith.addf %159, %192 : vector<2x256xf32>
    %194 = vector.extract_strided_slice %183 {offsets = [0, 32], sizes = [2, 256], strides = [1, 1]} : vector<2x352xf32> to vector<2x256xf32>
    %195 = vector.extract_strided_slice %67 {offsets = [0, 16], sizes = [2, 1], strides = [1, 1]} : vector<2x49xf32> to vector<2x1xf32>
    %196 = vector.broadcast %195 : vector<2x1xf32> to vector<2x256xf32>
    %197 = arith.mulf %196, %194 : vector<2x256xf32>
    %198 = arith.addf %164, %197 : vector<2x256xf32>
    %199 = vector.extract_strided_slice %183 {offsets = [0, 48], sizes = [2, 256], strides = [1, 1]} : vector<2x352xf32> to vector<2x256xf32>
    %200 = vector.extract_strided_slice %67 {offsets = [0, 23], sizes = [2, 1], strides = [1, 1]} : vector<2x49xf32> to vector<2x1xf32>
    %201 = vector.broadcast %200 : vector<2x1xf32> to vector<2x256xf32>
    %202 = arith.mulf %201, %199 : vector<2x256xf32>
    %203 = arith.addf %169, %202 : vector<2x256xf32>
    %204 = vector.extract_strided_slice %183 {offsets = [0, 64], sizes = [2, 256], strides = [1, 1]} : vector<2x352xf32> to vector<2x256xf32>
    %205 = vector.extract_strided_slice %67 {offsets = [0, 30], sizes = [2, 1], strides = [1, 1]} : vector<2x49xf32> to vector<2x1xf32>
    %206 = vector.broadcast %205 : vector<2x1xf32> to vector<2x256xf32>
    %207 = arith.mulf %206, %204 : vector<2x256xf32>
    %208 = arith.addf %188, %207 : vector<2x256xf32>
    %209 = vector.extract_strided_slice %183 {offsets = [0, 80], sizes = [2, 256], strides = [1, 1]} : vector<2x352xf32> to vector<2x256xf32>
    %210 = vector.extract_strided_slice %67 {offsets = [0, 37], sizes = [2, 1], strides = [1, 1]} : vector<2x49xf32> to vector<2x1xf32>
    %211 = vector.broadcast %210 : vector<2x1xf32> to vector<2x256xf32>
    %212 = arith.mulf %211, %209 : vector<2x256xf32>
    %213 = arith.addf %193, %212 : vector<2x256xf32>
    %214 = vector.extract_strided_slice %183 {offsets = [0, 96], sizes = [2, 256], strides = [1, 1]} : vector<2x352xf32> to vector<2x256xf32>
    %215 = vector.extract_strided_slice %67 {offsets = [0, 44], sizes = [2, 1], strides = [1, 1]} : vector<2x49xf32> to vector<2x1xf32>
    %216 = vector.broadcast %215 : vector<2x1xf32> to vector<2x256xf32>
    %217 = arith.mulf %216, %214 : vector<2x256xf32>
    %218 = arith.addf %198, %217 : vector<2x256xf32>
    %219 = vector.extract_strided_slice %49 {offsets = [0, 3], sizes = [2, 352], strides = [1, 1]} : vector<2x358xf32> to vector<2x352xf32>
    %220 = vector.extract_strided_slice %219 {offsets = [0, 0], sizes = [2, 256], strides = [1, 1]} : vector<2x352xf32> to vector<2x256xf32>
    %221 = vector.extract_strided_slice %67 {offsets = [0, 3], sizes = [2, 1], strides = [1, 1]} : vector<2x49xf32> to vector<2x1xf32>
    %222 = vector.broadcast %221 : vector<2x1xf32> to vector<2x256xf32>
    %223 = arith.mulf %222, %220 : vector<2x256xf32>
    %224 = arith.addf %203, %223 : vector<2x256xf32>
    %225 = vector.extract_strided_slice %219 {offsets = [0, 16], sizes = [2, 256], strides = [1, 1]} : vector<2x352xf32> to vector<2x256xf32>
    %226 = vector.extract_strided_slice %67 {offsets = [0, 10], sizes = [2, 1], strides = [1, 1]} : vector<2x49xf32> to vector<2x1xf32>
    %227 = vector.broadcast %226 : vector<2x1xf32> to vector<2x256xf32>
    %228 = arith.mulf %227, %225 : vector<2x256xf32>
    %229 = arith.addf %208, %228 : vector<2x256xf32>
    %230 = vector.extract_strided_slice %219 {offsets = [0, 32], sizes = [2, 256], strides = [1, 1]} : vector<2x352xf32> to vector<2x256xf32>
    %231 = vector.extract_strided_slice %67 {offsets = [0, 17], sizes = [2, 1], strides = [1, 1]} : vector<2x49xf32> to vector<2x1xf32>
    %232 = vector.broadcast %231 : vector<2x1xf32> to vector<2x256xf32>
    %233 = arith.mulf %232, %230 : vector<2x256xf32>
    %234 = arith.addf %213, %233 : vector<2x256xf32>
    %235 = vector.extract_strided_slice %219 {offsets = [0, 48], sizes = [2, 256], strides = [1, 1]} : vector<2x352xf32> to vector<2x256xf32>
    %236 = vector.extract_strided_slice %67 {offsets = [0, 24], sizes = [2, 1], strides = [1, 1]} : vector<2x49xf32> to vector<2x1xf32>
    %237 = vector.broadcast %236 : vector<2x1xf32> to vector<2x256xf32>
    %238 = arith.mulf %237, %235 : vector<2x256xf32>
    %239 = arith.addf %218, %238 : vector<2x256xf32>
    %240 = vector.extract_strided_slice %219 {offsets = [0, 64], sizes = [2, 256], strides = [1, 1]} : vector<2x352xf32> to vector<2x256xf32>
    %241 = vector.extract_strided_slice %67 {offsets = [0, 31], sizes = [2, 1], strides = [1, 1]} : vector<2x49xf32> to vector<2x1xf32>
    %242 = vector.broadcast %241 : vector<2x1xf32> to vector<2x256xf32>
    %243 = arith.mulf %242, %240 : vector<2x256xf32>
    %244 = arith.addf %224, %243 : vector<2x256xf32>
    %245 = vector.extract_strided_slice %219 {offsets = [0, 80], sizes = [2, 256], strides = [1, 1]} : vector<2x352xf32> to vector<2x256xf32>
    %246 = vector.extract_strided_slice %67 {offsets = [0, 38], sizes = [2, 1], strides = [1, 1]} : vector<2x49xf32> to vector<2x1xf32>
    %247 = vector.broadcast %246 : vector<2x1xf32> to vector<2x256xf32>
    %248 = arith.mulf %247, %245 : vector<2x256xf32>
    %249 = arith.addf %229, %248 : vector<2x256xf32>
    %250 = vector.extract_strided_slice %219 {offsets = [0, 96], sizes = [2, 256], strides = [1, 1]} : vector<2x352xf32> to vector<2x256xf32>
    %251 = vector.extract_strided_slice %67 {offsets = [0, 45], sizes = [2, 1], strides = [1, 1]} : vector<2x49xf32> to vector<2x1xf32>
    %252 = vector.broadcast %251 : vector<2x1xf32> to vector<2x256xf32>
    %253 = arith.mulf %252, %250 : vector<2x256xf32>
    %254 = arith.addf %234, %253 : vector<2x256xf32>
    %255 = vector.extract_strided_slice %49 {offsets = [0, 4], sizes = [2, 352], strides = [1, 1]} : vector<2x358xf32> to vector<2x352xf32>
    %c1_i32_41 = arith.constant 1 : i32
    %256 = vector.broadcast %c1_i32_41 : i32 to vector<1x352xi32>
    %257 = arith.addi %66, %256 : vector<1x352xi32>
    %c0_i32_42 = arith.constant 0 : i32
    %258 = vector.broadcast %c0_i32_42 : i32 to vector<1x352xi32>
    %259 = arith.cmpi sge, %257, %258 : vector<1x352xi32>
    %c1_i32_43 = arith.constant 1 : i32
    %260 = vector.broadcast %c1_i32_43 : i32 to vector<1x352xi32>
    %261 = arith.addi %66, %260 : vector<1x352xi32>
    %c16_i32_44 = arith.constant 16 : i32
    %262 = vector.broadcast %c16_i32_44 : i32 to vector<1x352xi32>
    %263 = arith.cmpi slt, %261, %262 : vector<1x352xi32>
    %264 = arith.andi %259, %263 : vector<1x352xi1>
    %cst_45 = arith.constant 0.000000e+00 : f32
    %265 = vector.shape_cast %264 : vector<1x352xi1> to vector<1x352xi1>
    %266 = vector.broadcast %265 : vector<1x352xi1> to vector<2x352xi1>
    %267 = vector.broadcast %cst_45 : f32 to vector<2x352xf32>
    %268 = arith.select %266, %255, %267 : vector<2x352xi1>, vector<2x352xf32>
    %269 = vector.extract_strided_slice %268 {offsets = [0, 0], sizes = [2, 256], strides = [1, 1]} : vector<2x352xf32> to vector<2x256xf32>
    %270 = vector.extract_strided_slice %67 {offsets = [0, 4], sizes = [2, 1], strides = [1, 1]} : vector<2x49xf32> to vector<2x1xf32>
    %271 = vector.broadcast %270 : vector<2x1xf32> to vector<2x256xf32>
    %272 = arith.mulf %271, %269 : vector<2x256xf32>
    %273 = arith.addf %239, %272 : vector<2x256xf32>
    %274 = vector.extract_strided_slice %268 {offsets = [0, 16], sizes = [2, 256], strides = [1, 1]} : vector<2x352xf32> to vector<2x256xf32>
    %275 = vector.extract_strided_slice %67 {offsets = [0, 11], sizes = [2, 1], strides = [1, 1]} : vector<2x49xf32> to vector<2x1xf32>
    %276 = vector.broadcast %275 : vector<2x1xf32> to vector<2x256xf32>
    %277 = arith.mulf %276, %274 : vector<2x256xf32>
    %278 = arith.addf %244, %277 : vector<2x256xf32>
    %279 = vector.extract_strided_slice %268 {offsets = [0, 32], sizes = [2, 256], strides = [1, 1]} : vector<2x352xf32> to vector<2x256xf32>
    %280 = vector.extract_strided_slice %67 {offsets = [0, 18], sizes = [2, 1], strides = [1, 1]} : vector<2x49xf32> to vector<2x1xf32>
    %281 = vector.broadcast %280 : vector<2x1xf32> to vector<2x256xf32>
    %282 = arith.mulf %281, %279 : vector<2x256xf32>
    %283 = arith.addf %249, %282 : vector<2x256xf32>
    %284 = vector.extract_strided_slice %268 {offsets = [0, 48], sizes = [2, 256], strides = [1, 1]} : vector<2x352xf32> to vector<2x256xf32>
    %285 = vector.extract_strided_slice %67 {offsets = [0, 25], sizes = [2, 1], strides = [1, 1]} : vector<2x49xf32> to vector<2x1xf32>
    %286 = vector.broadcast %285 : vector<2x1xf32> to vector<2x256xf32>
    %287 = arith.mulf %286, %284 : vector<2x256xf32>
    %288 = arith.addf %254, %287 : vector<2x256xf32>
    %289 = vector.extract_strided_slice %268 {offsets = [0, 64], sizes = [2, 256], strides = [1, 1]} : vector<2x352xf32> to vector<2x256xf32>
    %290 = vector.extract_strided_slice %67 {offsets = [0, 32], sizes = [2, 1], strides = [1, 1]} : vector<2x49xf32> to vector<2x1xf32>
    %291 = vector.broadcast %290 : vector<2x1xf32> to vector<2x256xf32>
    %292 = arith.mulf %291, %289 : vector<2x256xf32>
    %293 = arith.addf %273, %292 : vector<2x256xf32>
    %294 = vector.extract_strided_slice %268 {offsets = [0, 80], sizes = [2, 256], strides = [1, 1]} : vector<2x352xf32> to vector<2x256xf32>
    %295 = vector.extract_strided_slice %67 {offsets = [0, 39], sizes = [2, 1], strides = [1, 1]} : vector<2x49xf32> to vector<2x1xf32>
    %296 = vector.broadcast %295 : vector<2x1xf32> to vector<2x256xf32>
    %297 = arith.mulf %296, %294 : vector<2x256xf32>
    %298 = arith.addf %278, %297 : vector<2x256xf32>
    %299 = vector.extract_strided_slice %268 {offsets = [0, 96], sizes = [2, 256], strides = [1, 1]} : vector<2x352xf32> to vector<2x256xf32>
    %300 = vector.extract_strided_slice %67 {offsets = [0, 46], sizes = [2, 1], strides = [1, 1]} : vector<2x49xf32> to vector<2x1xf32>
    %301 = vector.broadcast %300 : vector<2x1xf32> to vector<2x256xf32>
    %302 = arith.mulf %301, %299 : vector<2x256xf32>
    %303 = arith.addf %283, %302 : vector<2x256xf32>
    %304 = vector.extract_strided_slice %49 {offsets = [0, 5], sizes = [2, 352], strides = [1, 1]} : vector<2x358xf32> to vector<2x352xf32>
    %c2_i32 = arith.constant 2 : i32
    %305 = vector.broadcast %c2_i32 : i32 to vector<1x352xi32>
    %306 = arith.addi %66, %305 : vector<1x352xi32>
    %c0_i32_46 = arith.constant 0 : i32
    %307 = vector.broadcast %c0_i32_46 : i32 to vector<1x352xi32>
    %308 = arith.cmpi sge, %306, %307 : vector<1x352xi32>
    %c2_i32_47 = arith.constant 2 : i32
    %309 = vector.broadcast %c2_i32_47 : i32 to vector<1x352xi32>
    %310 = arith.addi %66, %309 : vector<1x352xi32>
    %c16_i32_48 = arith.constant 16 : i32
    %311 = vector.broadcast %c16_i32_48 : i32 to vector<1x352xi32>
    %312 = arith.cmpi slt, %310, %311 : vector<1x352xi32>
    %313 = arith.andi %308, %312 : vector<1x352xi1>
    %cst_49 = arith.constant 0.000000e+00 : f32
    %314 = vector.shape_cast %313 : vector<1x352xi1> to vector<1x352xi1>
    %315 = vector.broadcast %314 : vector<1x352xi1> to vector<2x352xi1>
    %316 = vector.broadcast %cst_49 : f32 to vector<2x352xf32>
    %317 = arith.select %315, %304, %316 : vector<2x352xi1>, vector<2x352xf32>
    %318 = vector.extract_strided_slice %317 {offsets = [0, 0], sizes = [2, 256], strides = [1, 1]} : vector<2x352xf32> to vector<2x256xf32>
    %319 = vector.extract_strided_slice %67 {offsets = [0, 5], sizes = [2, 1], strides = [1, 1]} : vector<2x49xf32> to vector<2x1xf32>
    %320 = vector.broadcast %319 : vector<2x1xf32> to vector<2x256xf32>
    %321 = arith.mulf %320, %318 : vector<2x256xf32>
    %322 = arith.addf %288, %321 : vector<2x256xf32>
    %323 = vector.extract_strided_slice %317 {offsets = [0, 16], sizes = [2, 256], strides = [1, 1]} : vector<2x352xf32> to vector<2x256xf32>
    %324 = vector.extract_strided_slice %67 {offsets = [0, 12], sizes = [2, 1], strides = [1, 1]} : vector<2x49xf32> to vector<2x1xf32>
    %325 = vector.broadcast %324 : vector<2x1xf32> to vector<2x256xf32>
    %326 = arith.mulf %325, %323 : vector<2x256xf32>
    %327 = arith.addf %293, %326 : vector<2x256xf32>
    %328 = vector.extract_strided_slice %317 {offsets = [0, 32], sizes = [2, 256], strides = [1, 1]} : vector<2x352xf32> to vector<2x256xf32>
    %329 = vector.extract_strided_slice %67 {offsets = [0, 19], sizes = [2, 1], strides = [1, 1]} : vector<2x49xf32> to vector<2x1xf32>
    %330 = vector.broadcast %329 : vector<2x1xf32> to vector<2x256xf32>
    %331 = arith.mulf %330, %328 : vector<2x256xf32>
    %332 = arith.addf %298, %331 : vector<2x256xf32>
    %333 = vector.extract_strided_slice %317 {offsets = [0, 48], sizes = [2, 256], strides = [1, 1]} : vector<2x352xf32> to vector<2x256xf32>
    %334 = vector.extract_strided_slice %67 {offsets = [0, 26], sizes = [2, 1], strides = [1, 1]} : vector<2x49xf32> to vector<2x1xf32>
    %335 = vector.broadcast %334 : vector<2x1xf32> to vector<2x256xf32>
    %336 = arith.mulf %335, %333 : vector<2x256xf32>
    %337 = arith.addf %303, %336 : vector<2x256xf32>
    %338 = vector.extract_strided_slice %317 {offsets = [0, 64], sizes = [2, 256], strides = [1, 1]} : vector<2x352xf32> to vector<2x256xf32>
    %339 = vector.extract_strided_slice %67 {offsets = [0, 33], sizes = [2, 1], strides = [1, 1]} : vector<2x49xf32> to vector<2x1xf32>
    %340 = vector.broadcast %339 : vector<2x1xf32> to vector<2x256xf32>
    %341 = arith.mulf %340, %338 : vector<2x256xf32>
    %342 = arith.addf %322, %341 : vector<2x256xf32>
    %343 = vector.extract_strided_slice %317 {offsets = [0, 80], sizes = [2, 256], strides = [1, 1]} : vector<2x352xf32> to vector<2x256xf32>
    %344 = vector.extract_strided_slice %67 {offsets = [0, 40], sizes = [2, 1], strides = [1, 1]} : vector<2x49xf32> to vector<2x1xf32>
    %345 = vector.broadcast %344 : vector<2x1xf32> to vector<2x256xf32>
    %346 = arith.mulf %345, %343 : vector<2x256xf32>
    %347 = arith.addf %327, %346 : vector<2x256xf32>
    %348 = vector.extract_strided_slice %317 {offsets = [0, 96], sizes = [2, 256], strides = [1, 1]} : vector<2x352xf32> to vector<2x256xf32>
    %349 = vector.extract_strided_slice %67 {offsets = [0, 47], sizes = [2, 1], strides = [1, 1]} : vector<2x49xf32> to vector<2x1xf32>
    %350 = vector.broadcast %349 : vector<2x1xf32> to vector<2x256xf32>
    %351 = arith.mulf %350, %348 : vector<2x256xf32>
    %352 = arith.addf %332, %351 : vector<2x256xf32>
    %353 = vector.extract_strided_slice %49 {offsets = [0, 6], sizes = [2, 352], strides = [1, 1]} : vector<2x358xf32> to vector<2x352xf32>
    %c3_i32 = arith.constant 3 : i32
    %354 = vector.broadcast %c3_i32 : i32 to vector<1x352xi32>
    %355 = arith.addi %66, %354 : vector<1x352xi32>
    %c0_i32_50 = arith.constant 0 : i32
    %356 = vector.broadcast %c0_i32_50 : i32 to vector<1x352xi32>
    %357 = arith.cmpi sge, %355, %356 : vector<1x352xi32>
    %c3_i32_51 = arith.constant 3 : i32
    %358 = vector.broadcast %c3_i32_51 : i32 to vector<1x352xi32>
    %359 = arith.addi %66, %358 : vector<1x352xi32>
    %c16_i32_52 = arith.constant 16 : i32
    %360 = vector.broadcast %c16_i32_52 : i32 to vector<1x352xi32>
    %361 = arith.cmpi slt, %359, %360 : vector<1x352xi32>
    %362 = arith.andi %357, %361 : vector<1x352xi1>
    %cst_53 = arith.constant 0.000000e+00 : f32
    %363 = vector.shape_cast %362 : vector<1x352xi1> to vector<1x352xi1>
    %364 = vector.broadcast %363 : vector<1x352xi1> to vector<2x352xi1>
    %365 = vector.broadcast %cst_53 : f32 to vector<2x352xf32>
    %366 = arith.select %364, %353, %365 : vector<2x352xi1>, vector<2x352xf32>
    %367 = vector.extract_strided_slice %366 {offsets = [0, 0], sizes = [2, 256], strides = [1, 1]} : vector<2x352xf32> to vector<2x256xf32>
    %368 = vector.extract_strided_slice %67 {offsets = [0, 6], sizes = [2, 1], strides = [1, 1]} : vector<2x49xf32> to vector<2x1xf32>
    %369 = vector.broadcast %368 : vector<2x1xf32> to vector<2x256xf32>
    %370 = arith.mulf %369, %367 : vector<2x256xf32>
    %371 = arith.addf %337, %370 : vector<2x256xf32>
    %372 = vector.extract_strided_slice %366 {offsets = [0, 16], sizes = [2, 256], strides = [1, 1]} : vector<2x352xf32> to vector<2x256xf32>
    %373 = vector.extract_strided_slice %67 {offsets = [0, 13], sizes = [2, 1], strides = [1, 1]} : vector<2x49xf32> to vector<2x1xf32>
    %374 = vector.broadcast %373 : vector<2x1xf32> to vector<2x256xf32>
    %375 = arith.mulf %374, %372 : vector<2x256xf32>
    %376 = arith.addf %342, %375 : vector<2x256xf32>
    %377 = vector.extract_strided_slice %366 {offsets = [0, 32], sizes = [2, 256], strides = [1, 1]} : vector<2x352xf32> to vector<2x256xf32>
    %378 = vector.extract_strided_slice %67 {offsets = [0, 20], sizes = [2, 1], strides = [1, 1]} : vector<2x49xf32> to vector<2x1xf32>
    %379 = vector.broadcast %378 : vector<2x1xf32> to vector<2x256xf32>
    %380 = arith.mulf %379, %377 : vector<2x256xf32>
    %381 = arith.addf %347, %380 : vector<2x256xf32>
    %382 = vector.extract_strided_slice %366 {offsets = [0, 48], sizes = [2, 256], strides = [1, 1]} : vector<2x352xf32> to vector<2x256xf32>
    %383 = vector.extract_strided_slice %67 {offsets = [0, 27], sizes = [2, 1], strides = [1, 1]} : vector<2x49xf32> to vector<2x1xf32>
    %384 = vector.broadcast %383 : vector<2x1xf32> to vector<2x256xf32>
    %385 = arith.mulf %384, %382 : vector<2x256xf32>
    %386 = arith.addf %352, %385 : vector<2x256xf32>
    %387 = vector.extract_strided_slice %366 {offsets = [0, 64], sizes = [2, 256], strides = [1, 1]} : vector<2x352xf32> to vector<2x256xf32>
    %388 = vector.extract_strided_slice %67 {offsets = [0, 34], sizes = [2, 1], strides = [1, 1]} : vector<2x49xf32> to vector<2x1xf32>
    %389 = vector.broadcast %388 : vector<2x1xf32> to vector<2x256xf32>
    %390 = arith.mulf %389, %387 : vector<2x256xf32>
    %391 = arith.addf %371, %390 : vector<2x256xf32>
    %392 = vector.extract_strided_slice %366 {offsets = [0, 80], sizes = [2, 256], strides = [1, 1]} : vector<2x352xf32> to vector<2x256xf32>
    %393 = vector.extract_strided_slice %67 {offsets = [0, 41], sizes = [2, 1], strides = [1, 1]} : vector<2x49xf32> to vector<2x1xf32>
    %394 = vector.broadcast %393 : vector<2x1xf32> to vector<2x256xf32>
    %395 = arith.mulf %394, %392 : vector<2x256xf32>
    %396 = arith.addf %376, %395 : vector<2x256xf32>
    %397 = vector.extract_strided_slice %366 {offsets = [0, 96], sizes = [2, 256], strides = [1, 1]} : vector<2x352xf32> to vector<2x256xf32>
    %398 = vector.extract_strided_slice %67 {offsets = [0, 48], sizes = [2, 1], strides = [1, 1]} : vector<2x49xf32> to vector<2x1xf32>
    %399 = vector.broadcast %398 : vector<2x1xf32> to vector<2x256xf32>
    %400 = arith.mulf %399, %397 : vector<2x256xf32>
    %401 = arith.addf %381, %400 : vector<2x256xf32>
    %402 = arith.addf %401, %396 : vector<2x256xf32>
    %403 = arith.addf %402, %391 : vector<2x256xf32>
    %404 = arith.addf %403, %386 : vector<2x256xf32>
    %405 = vector.extract_strided_slice %404 {offsets = [0, 0], sizes = [1, 256], strides = [1, 1]} : vector<2x256xf32> to vector<1x256xf32>
    %406 = vector.extract_strided_slice %404 {offsets = [1, 0], sizes = [1, 256], strides = [1, 1]} : vector<2x256xf32> to vector<1x256xf32>
    %407 = arith.addf %405, %406 : vector<1x256xf32>
    %cst_54 = arith.constant 0.000000e+00 : f32
    %408 = vector.broadcast %cst_54 : f32 to vector<1x256xf32>
    %409 = arith.subf %408, %407 : vector<1x256xf32>
    %410 = math.exp %409 : vector<1x256xf32>
    %cst_55 = arith.constant 1.000000e+00 : f32
    %411 = vector.broadcast %cst_55 : f32 to vector<1x256xf32>
    %412 = arith.addf %411, %410 : vector<1x256xf32>
    %413 = tpu.reciprocal %412 : vector<1x256xf32> -> vector<1x256xf32>
    %414 = vector.shape_cast %413 : vector<1x256xf32> to vector<1x1x256xf32>
    %415 = vector.broadcast %414 : vector<1x1x256xf32> to vector<1x32x256xf32>
    %416 = arith.mulf %42, %415 : vector<1x32x256xf32>
    %c0_56 = arith.constant 0 : index
    %c0_57 = arith.constant 0 : index
    %c0_58 = arith.constant 0 : index
    %417 = vector.load %arg5[%c0_56, %c0_57, %c0_58] : memref<1x32x256xf32, #tpu.memory_space<vmem>>, vector<1x32x256xf32>
    tpu.vector_store %arg5[%c0_56, %c0_57, %c0_58], %416 {strides = array<i32>} : memref<1x32x256xf32, #tpu.memory_space<vmem>>, vector<1x32x256xf32>,
    return
  }
  func.func @transform_0(%arg0: i32) -> (i32, i32, i32) {
    %c0_i32 = arith.constant 0 : i32
    %c0_i32_0 = arith.constant 0 : i32
    %c0_i32_1 = arith.constant 0 : i32
    return %arg0, %c0_i32, %c0_i32_0 : i32, i32, i32
  }
  func.func @transform_1(%arg0: i32) -> (i32, i32) {
    %c0_i32 = arith.constant 0 : i32
    %c0_i32_0 = arith.constant 0 : i32
    %c0_i32_1 = arith.constant 0 : i32
    return %c0_i32, %c0_i32_0 : i32, i32
  }
  func.func @transform_2(%arg0: i32) -> (i32, i32) {
    %c0_i32 = arith.constant 0 : i32
    %c0_i32_0 = arith.constant 0 : i32
    %c0_i32_1 = arith.constant 0 : i32
    return %c0_i32, %c0_i32_0 : i32, i32
  }
  func.func @transform_3(%arg0: i32) -> (i32, i32) {
    %c0_i32 = arith.constant 0 : i32
    %c0_i32_0 = arith.constant 0 : i32
    %c0_i32_1 = arith.constant 0 : i32
    return %c0_i32, %c0_i32_0 : i32, i32
  }
  func.func @transform_4(%arg0: i32) -> (i32, i32, i32) {
    %c0_i32 = arith.constant 0 : i32
    %c0_i32_0 = arith.constant 0 : i32
    %c0_i32_1 = arith.constant 0 : i32
    return %arg0, %c0_i32, %c0_i32_0 : i32, i32, i32
  }
}

</mosaic_0001>

<llo_original>
// kernel: tpu_custom_call.1
$region0: #{tpu_custom_call.1}
  #allocation0 [shape = 'u32[]', space=smem, size = 0x4, offset = 0x4, fixed_abs, tag = 'smem constant byte address 0x4 - core index']
  #allocation1 [shape = 'u32[144,128]{1,0:T(1,128)}', space=vmem, size = 0x12000, scoped, tag = 'internal scratch']
  %s0 = inlined_call_operand.hbm [shape: f32[2,32,256], index: 0, kind: input, shape index: {}]
  %s1 = inlined_call_operand.vmem [shape: f32[32,2], index: 1, kind: input, shape index: {}]
  %s2 = inlined_call_operand.vmem [shape: f32[32,2], index: 2, kind: input, shape index: {}]
  %s3 = inlined_call_operand.vmem [shape: f32[2,49], index: 3, kind: input, shape index: {}]
  %s4 = inlined_call_operand.hbm [shape: f32[2,32,256], index: 4, kind: output, shape index: {}]
  %s5 = sld [smem:[#allocation0]]
  $region53: #{tpu_custom_call.1} parent=0
    _
  %s7 = ssub.s32 1, %s5
  %s8 = scalar_select 0, %s7, %s5
  $region1: #{tpu_custom_call.1} parent=0
    #allocation2 [shape = 'u8[65536]{0}', space=vmem, size = 0x10000, scoped, tag = 'input window, operand 0']
    #allocation3 [shape = 's32[2]{0}', space=sflag, size = 0x8, scoped, tag = 'scoped memory for tpu_custom_call.1']
    #allocation4 [shape = 's32[2]{0}', space=sflag, size = 0x8, scoped, tag = 'scoped memory for tpu_custom_call.1']
    #allocation5 [shape = 'u8[65536]{0}', space=vmem, size = 0x10000, scoped, tag = 'output window, operand 0']
    %9 = vsyncpa [#allocation3], 0
    %s10 = scalar_lea.sflag [#allocation3], 1
    %11 = vsyncpa %s10, 0
    %12 = vsyncpa [#allocation4], 0
    %s13 = scalar_lea.sflag [#allocation4], 1
    %14 = vsyncpa %s13, 0
    loop: start=0, step=1, limit=4
    $region2: #{tpu_custom_call.1} parent=1 // loop_pre_header
      _
    $region3: #{tpu_custom_call.1} parent=1 // loop_header
      %s16 = sphi 0, %s20
      %p17 = scmp.ge.s32.totalorder %s16, 4
      %s26 = sphi 0, %s28
      %s29 = sphi 0, %s26
      %s30 = sphi 0, %s29
      %s46 = sphi 0, %s30
      %s50 = sphi 0, %s50
      %s52 = sphi 0, %s50
      %s53 = sphi 0, %s52
      %s67 = sphi 0, %s53
      %s71 = sphi 0, %s71
      %s73 = sphi 0, %s71
      %s74 = sphi 0, %s73
      %s88 = sphi 0, %s74
      %s92 = sphi 0, %s92
      %s94 = sphi 0, %s92
      %s95 = sphi 0, %s94
      %s109 = sphi 0, %s95
      %s115 = sphi 0, %s117
      %s118 = sphi 0, %s115
      %s119 = sphi 0, %s118
      %s135 = sphi 0, %s119
    $region4: #{tpu_custom_call.1} parent=1 // loop_header_branch
      %19 = sbr.rel (%p17) target = $region8
    $region5: #{tpu_custom_call.1} parent=1 // loop_body
      %s21 = ssub.s32 %s16, 1
      %s22 = ssub.s32 %s16, 2
      %s23 = sadd.s32 %s16, 1
      %s24 = ssub.s32 %s16, %s23
      %p25 = scmp.eq.s32.totalorder %s24, 0
      %s27 = sadd.s32 %s26, 1
      %s28 = scalar_select %p25, %s26, %s27
      %p31 = pneg %p25
      %p32 = scmp.eq.s32.totalorder %s16, 1
      %p33 = por %p31, %p32
      %p34 = scmp.ne.s32.totalorder %s26, %s29
      %p35 = scmp.eq.s32.totalorder %s16, 0
      %p36 = por %p34, %p35
      %p37 = scmp.ne.s32.totalorder %s26, %s29
      %p38 = scmp.eq.s32.totalorder %s21, 1
      %p39 = por %p37, %p38
      %p40 = scmp.ne.s32.totalorder %s29, %s30
      %p41 = scmp.eq.s32.totalorder %s21, 0
      %p42 = por %p40, %p41
      %p43 = scmp.ne.s32.totalorder %s29, %s30
      %p44 = scmp.eq.s32.totalorder %s22, 1
      %p45 = por %p43, %p44
      %p47 = scmp.ne.s32.totalorder %s30, %s46
      %p48 = scmp.eq.s32.totalorder %s22, 0
      %p49 = por %p47, %p48
      %s51 = sadd.s32 %s50, 1
      %p54 = scmp.eq.s32.totalorder %s16, 1
      %p55 = scmp.ne.s32.totalorder %s50, %s52
      %p56 = scmp.eq.s32.totalorder %s16, 0
      %p57 = por %p55, %p56
      %p58 = scmp.ne.s32.totalorder %s50, %s52
      %p59 = scmp.eq.s32.totalorder %s21, 1
      %p60 = por %p58, %p59
      %p61 = scmp.ne.s32.totalorder %s52, %s53
      %p62 = scmp.eq.s32.totalorder %s21, 0
      %p63 = por %p61, %p62
      %p64 = scmp.ne.s32.totalorder %s52, %s53
      %p65 = scmp.eq.s32.totalorder %s22, 1
      %p66 = por %p64, %p65
      %p68 = scmp.ne.s32.totalorder %s53, %s67
      %p69 = scmp.eq.s32.totalorder %s22, 0
      %p70 = por %p68, %p69
      %s72 = sadd.s32 %s71, 1
      %p75 = scmp.eq.s32.totalorder %s16, 1
      %p76 = scmp.ne.s32.totalorder %s71, %s73
      %p77 = scmp.eq.s32.totalorder %s16, 0
      %p78 = por %p76, %p77
      %p79 = scmp.ne.s32.totalorder %s71, %s73
      %p80 = scmp.eq.s32.totalorder %s21, 1
      %p81 = por %p79, %p80
      %p82 = scmp.ne.s32.totalorder %s73, %s74
      %p83 = scmp.eq.s32.totalorder %s21, 0
      %p84 = por %p82, %p83
      %p85 = scmp.ne.s32.totalorder %s73, %s74
      %p86 = scmp.eq.s32.totalorder %s22, 1
      %p87 = por %p85, %p86
      %p89 = scmp.ne.s32.totalorder %s74, %s88
      %p90 = scmp.eq.s32.totalorder %s22, 0
      %p91 = por %p89, %p90
      %s93 = sadd.s32 %s92, 1
      %p96 = scmp.eq.s32.totalorder %s16, 1
      %p97 = scmp.ne.s32.totalorder %s92, %s94
      %p98 = scmp.eq.s32.totalorder %s16, 0
      %p99 = por %p97, %p98
      %p100 = scmp.ne.s32.totalorder %s92, %s94
      %p101 = scmp.eq.s32.totalorder %s21, 1
      %p102 = por %p100, %p101
      %p103 = scmp.ne.s32.totalorder %s94, %s95
      %p104 = scmp.eq.s32.totalorder %s21, 0
      %p105 = por %p103, %p104
      %p106 = scmp.ne.s32.totalorder %s94, %s95
      %p107 = scmp.eq.s32.totalorder %s22, 1
      %p108 = por %p106, %p107
      %p110 = scmp.ne.s32.totalorder %s95, %s109
      %p111 = scmp.eq.s32.totalorder %s22, 0
      %p112 = por %p110, %p111
      %s113 = ssub.s32 %s16, %s23
      %p114 = scmp.eq.s32.totalorder %s113, 0
      %s116 = sadd.s32 %s115, 1
      %s117 = scalar_select %p114, %s115, %s116
      %p120 = pneg %p114
      %p121 = scmp.eq.s32.totalorder %s16, 1
      %p122 = por %p120, %p121
      %p123 = scmp.ne.s32.totalorder %s115, %s118
      %p124 = scmp.eq.s32.totalorder %s16, 0
      %p125 = por %p123, %p124
      %p126 = scmp.ne.s32.totalorder %s115, %s118
      %p127 = scmp.eq.s32.totalorder %s21, 1
      %p128 = por %p126, %p127
      %p129 = scmp.ne.s32.totalorder %s118, %s119
      %p130 = scmp.eq.s32.totalorder %s21, 0
      %p131 = por %p129, %p130
      %p132 = scmp.ne.s32.totalorder %s118, %s119
      %p133 = scmp.eq.s32.totalorder %s22, 1
      %p134 = por %p132, %p133
      %p136 = scmp.ne.s32.totalorder %s119, %s135
      %p137 = scmp.eq.s32.totalorder %s22, 0
      %p138 = por %p136, %p137
      %p139 = scmp.le.s32.totalorder 1, %s16
      %p140 = scmp.lt.s32.totalorder %s16, 3
      %p141 = pnand %p139, %p140
      %p142 = pneg %p141
      // Predicated region
      $region9: #{tpu_custom_call.1} parent=5 // pred_check
        _
      $region10: #{tpu_custom_call.1} parent=5 // pred_check_branch
        %144 = sbr.rel (%p141) target = $region12
      $region11: #{tpu_custom_call.1} parent=5 // pred_region
        %s145 = ssub.s32 %s16, 1
        // Predicated region
        $region13: #{tpu_custom_call.1} parent=11 // pred_check
          %p146 = pneg %p63
        $region14: #{tpu_custom_call.1} parent=11 // pred_check_branch
          %148 = sbr.rel (%p146) target = $region16
        $region15: #{tpu_custom_call.1} parent=11 // pred_region
          _
        $region16: #{tpu_custom_call.1} parent=11 // pred_fallthru
          _
        // Predicated region
        $region17: #{tpu_custom_call.1} parent=11 // pred_check
          %p149 = pneg %p84
        $region18: #{tpu_custom_call.1} parent=11 // pred_check_branch
          %151 = sbr.rel (%p149) target = $region20
        $region19: #{tpu_custom_call.1} parent=11 // pred_region
          _
        $region20: #{tpu_custom_call.1} parent=11 // pred_fallthru
          _
        // Predicated region
        $region21: #{tpu_custom_call.1} parent=11 // pred_check
          %p152 = pneg %p105
        $region22: #{tpu_custom_call.1} parent=11 // pred_check_branch
          %154 = sbr.rel (%p152) target = $region24
        $region23: #{tpu_custom_call.1} parent=11 // pred_region
          _
        $region24: #{tpu_custom_call.1} parent=11 // pred_fallthru
          _
      $region12: #{tpu_custom_call.1} parent=5 // pred_fallthru
        _
      %p155 = scmp.lt.s32.totalorder %s16, 2
      // Predicated region
      $region25: #{tpu_custom_call.1} parent=5 // pred_check
        %p156 = pneg %p155
      $region26: #{tpu_custom_call.1} parent=5 // pred_check_branch
        %158 = sbr.rel (%p156) target = $region28
      $region27: #{tpu_custom_call.1} parent=5 // pred_region
        // Predicated region
        $region29: #{tpu_custom_call.1} parent=27 // pred_check
          %p159 = pneg %p36
        $region30: #{tpu_custom_call.1} parent=27 // pred_check_branch
          %161 = sbr.rel (%p159) target = $region32
        $region31: #{tpu_custom_call.1} parent=27 // pred_region
          %s162 = sand.u32 %s26, 1
          %s163 = scalar_lea.sflag [#allocation3], %s162
          %s164 = sand.u32 %s26, 1
          %s165 = smul.addr %s164, 64
          %s166 = scalar_lea.vmem [#allocation2], %s165
          %s168 = ssub.s32 1024, 1024
          %169 = vsyncadd %s163, %s168
          %s170 = smul.addr %s16, 8
          %s171 = smul.addr %s170, 128
          %s172 = scalar_lea.hbm %s0, %s171
          %s173 = sshll.u32 %s166, 4
          %s174 = int_to_ptr.vmem [resolvable:$true] %s173
          %179 = dma.hbm_to_vmem [thread:$0]  %s172, 1024, %s174, %s163, 256, 256, 16
        $region32: #{tpu_custom_call.1} parent=27 // pred_fallthru
          _
      $region28: #{tpu_custom_call.1} parent=5 // pred_fallthru
        _
      %p180 = scmp.le.s32.totalorder 1, %s16
      %p181 = scmp.lt.s32.totalorder %s16, 3
      %p182 = pnand %p180, %p181
      %p183 = pneg %p182
      // Predicated region
      $region33: #{tpu_custom_call.1} parent=5 // pred_check
        _
      $region34: #{tpu_custom_call.1} parent=5 // pred_check_branch
        %185 = sbr.rel (%p182) target = $region36
      $region35: #{tpu_custom_call.1} parent=5 // pred_region
        %s186 = ssub.s32 %s16, 1
        %s187 = sand.u32 %s29, 1
        %s188 = scalar_lea.sflag [#allocation3], %s187
        %s189 = sand.u32 %s29, 1
        %s190 = smul.addr %s189, 64
        %s191 = scalar_lea.vmem [#allocation2], %s190
        // Predicated region
        $region37: #{tpu_custom_call.1} parent=35 // pred_check
          %p192 = pneg %p42
        $region38: #{tpu_custom_call.1} parent=35 // pred_check_branch
          %194 = sbr.rel (%p192) target = $region40
        $region39: #{tpu_custom_call.1} parent=35 // pred_region
          %195 = dma.done %s188, 1024
        $region40: #{tpu_custom_call.1} parent=35 // pred_fallthru
          _
        %s196 = sand.u32 %s29, 1
        %s197 = scalar_lea.sflag [#allocation3], %s196
        %s198 = sand.u32 %s29, 1
        %s199 = smul.addr %s198, 64
        %s200 = scalar_lea.vmem [#allocation2], %s199
        %p201 = pneg %p42
        %p202 = pneg %p39
        %p203 = pneg %p63
        %p204 = pneg %p60
        %p205 = pneg %p84
        %p206 = pneg %p81
        %p207 = pneg %p105
        %p208 = pneg %p102
        %p209 = pneg %p131
        %p210 = pneg %p128
        %s211 = sand.u32 %s118, 1
        %s212 = scalar_lea.sflag [#allocation4], %s211
        %s213 = sand.u32 %s118, 1
        %s214 = smul.addr %s213, 64
        %s215 = scalar_lea.vmem [#allocation5], %s214
        %v216 = vld [vmem:[%s191] sm:$0xff]
        %v217 = vld [vmem:[%s191 + $0x8] sm:$0xff]
        %v218 = vld [vmem:[%s191 + $0x10] sm:$0xff]
        %v219 = vld [vmem:[%s191 + $0x18] sm:$0xff]
        %v220 = vld [vmem:[%s191 + $0x20] sm:$0xff]
        %v221 = vld [vmem:[%s191 + $0x28] sm:$0xff]
        %v222 = vld [vmem:[%s191 + $0x30] sm:$0xff]
        %v223 = vld [vmem:[%s191 + $0x38] sm:$0xff]
        %v224 = vmax.f32 %v216, %v217
        %225 = vmax.xlane.f32.xlu0 %v224
        %v226 = vpop.xlane.xlu0 %225
        %v227 = vmax.f32 %v218, %v219
        %228 = vmax.xlane.f32.xlu0 %v227
        %v229 = vpop.xlane.xlu0 %228
        %v230 = vmax.f32 %v220, %v221
        %231 = vmax.xlane.f32.xlu0 %v230
        %v232 = vpop.xlane.xlu0 %231
        %v233 = vmax.f32 %v222, %v223
        %234 = vmax.xlane.f32.xlu0 %v233
        %v235 = vpop.xlane.xlu0 %234
        %v236 = vadd.f32 %v216, %v217
        %237 = vadd.xlane.f32.xlu0 %v236
        %v238 = vpop.xlane.xlu0 %237
        %v239 = vadd.f32 %v218, %v219
        %240 = vadd.xlane.f32.xlu0 %v239
        %v241 = vpop.xlane.xlu0 %240
        %v242 = vadd.f32 %v220, %v221
        %243 = vadd.xlane.f32.xlu0 %v242
        %v244 = vpop.xlane.xlu0 %243
        %v245 = vadd.f32 %v222, %v223
        %246 = vadd.xlane.f32.xlu0 %v245
        %v247 = vpop.xlane.xlu0 %246
        %v248 = vmul.f32 %v238, 0.00390625
        %v249 = vmul.f32 %v241, 0.00390625
        %v250 = vmul.f32 %v244, 0.00390625
        %v251 = vmul.f32 %v247, 0.00390625
        %v252 = vld [vmem:[%s1] sm:$0xff]
        %v253 = vld [vmem:[%s1 + $0x8] sm:$0xff]
        %v254 = vld [vmem:[%s1 + $0x10] sm:$0xff]
        %v255 = vld [vmem:[%s1 + $0x18] sm:$0xff]
        %257 = vset.pattern.permute.xlu0 0
        %258 = vperm.xlu0 %257, %v226
        %v259 = vpop.permute.xlu0 %258
        %262 = vset.pattern.permute.xlu0 0
        %263 = vperm.xlu0 %262, %v229
        %v264 = vpop.permute.xlu0 %263
        %267 = vset.pattern.permute.xlu0 0
        %268 = vperm.xlu0 %267, %v232
        %v269 = vpop.permute.xlu0 %268
        %272 = vset.pattern.permute.xlu0 0
        %273 = vperm.xlu0 %272, %v235
        %v274 = vpop.permute.xlu0 %273
        %277 = vset.pattern.permute.xlu0 0
        %278 = vperm.xlu0 %277, %v248
        %v279 = vpop.permute.xlu0 %278
        %282 = vset.pattern.permute.xlu0 0
        %283 = vperm.xlu0 %282, %v249
        %v284 = vpop.permute.xlu0 %283
        %287 = vset.pattern.permute.xlu0 0
        %288 = vperm.xlu0 %287, %v250
        %v289 = vpop.permute.xlu0 %288
        %292 = vset.pattern.permute.xlu0 0
        %293 = vperm.xlu0 %292, %v251
        %v294 = vpop.permute.xlu0 %293
        %v296 = vmul.f32 %v259, %v252
        %v297 = vmul.f32 %v264, %v253
        %v298 = vmul.f32 %v269, %v254
        %v299 = vmul.f32 %v274, %v255
        %v300 = vmul.f32 %v279, %v252
        %v301 = vmul.f32 %v284, %v253
        %v302 = vmul.f32 %v289, %v254
        %v303 = vmul.f32 %v294, %v255
        %vm304 = vcmask 15360
        %v305 = vsel %vm304, %v296, 0.0
        %v306 = vsel %vm304, %v297, 0.0
        %v307 = vadd.f32 %v305, %v306
        %v308 = vsel %vm304, %v298, 0.0
        %v309 = vadd.f32 %v307, %v308
        %v310 = vsel %vm304, %v299, 0.0
        %v311 = vadd.f32 %v309, %v310
        %v312 = vrot.slane %v311, 4
        %v313 = vadd.f32 %v311, %v312
        %v314 = vrot.slane %v313, 2
        %v315 = vadd.f32 %v313, %v314
        %v316 = vrot.slane %v315, 1
        %v317 = vadd.f32 %v315, %v316
        %v318 = vsel %vm304, %v300, 0.0
        %v319 = vsel %vm304, %v301, 0.0
        %v320 = vadd.f32 %v318, %v319
        %v321 = vsel %vm304, %v302, 0.0
        %v322 = vadd.f32 %v320, %v321
        %v323 = vsel %vm304, %v303, 0.0
        %v324 = vadd.f32 %v322, %v323
        %v325 = vrot.slane %v324, 4
        %v326 = vadd.f32 %v324, %v325
        %v327 = vrot.slane %v326, 2
        %v328 = vadd.f32 %v326, %v327
        %v329 = vrot.slane %v328, 1
        %v330 = vadd.f32 %v328, %v329
        %vm331 = vcmp.gt.f32.partialorder %v317, 0.0
        %vm332 = vcmp.gt.f32.partialorder %v330, 0.0
        %v333 = vmul.f32 %v317, 1.442695
        %v334 = vpow.pop %v333
        %v335 = vmul.f32 %v330, 1.442695
        %v336 = vpow.pop %v335
        %v337 = vsub.f32 %v334, 1.0
        %v338 = vsub.f32 %v336, 1.0
        %v339 = vmul.f32 %v337, 1.6732632
        %v340 = vmul.f32 %v338, 1.6732632
        %v341 = vsel %vm331, %v317, %v339
        %v342 = vsel %vm332, %v330, %v340
        %v343 = vmul.f32 %v341, 1.050701
        %v344 = vmul.f32 %v342, 1.050701
        %v345 = vld [vmem:[%s2] sm:$0xff]
        %v346 = vld [vmem:[%s2 + $0x8] sm:$0xff]
        %v347 = vld [vmem:[%s2 + $0x10] sm:$0xff]
        %v348 = vld [vmem:[%s2 + $0x18] sm:$0xff]
        %v349 = vmul.f32 %v343, %v345
        %v350 = vmul.f32 %v343, %v346
        %v351 = vmul.f32 %v343, %v347
        %v352 = vmul.f32 %v343, %v348
        %v353 = vmul.f32 %v344, %v345
        %v354 = vmul.f32 %v344, %v346
        %v355 = vmul.f32 %v344, %v347
        %v356 = vmul.f32 %v344, %v348
        %v357 = vsel %vm304, %v349, 0.0
        %358 = vadd.xlane.f32.xlu0 %v357
        %v359 = vpop.xlane.xlu0 %358
        %v360 = vsel %vm304, %v350, 0.0
        %361 = vadd.xlane.f32.xlu0 %v360
        %v362 = vpop.xlane.xlu0 %361
        %v363 = vsel %vm304, %v351, 0.0
        %364 = vadd.xlane.f32.xlu0 %v363
        %v365 = vpop.xlane.xlu0 %364
        %v366 = vsel %vm304, %v352, 0.0
        %367 = vadd.xlane.f32.xlu0 %v366
        %v368 = vpop.xlane.xlu0 %367
        %v369 = vsel %vm304, %v353, 0.0
        %370 = vadd.xlane.f32.xlu0 %v369
        %v371 = vpop.xlane.xlu0 %370
        %v372 = vsel %vm304, %v354, 0.0
        %373 = vadd.xlane.f32.xlu0 %v372
        %v374 = vpop.xlane.xlu0 %373
        %v375 = vsel %vm304, %v355, 0.0
        %376 = vadd.xlane.f32.xlu0 %v375
        %v377 = vpop.xlane.xlu0 %376
        %v378 = vsel %vm304, %v356, 0.0
        %379 = vadd.xlane.f32.xlu0 %v378
        %v380 = vpop.xlane.xlu0 %379
        %v381 = vadd.f32 %v359, %v371
        %v382 = vadd.f32 %v362, %v374
        %v383 = vadd.f32 %v365, %v377
        %v384 = vadd.f32 %v368, %v380
        %v385 = vsub.f32 0.0, %v381
        %v386 = vsub.f32 0.0, %v382
        %v387 = vsub.f32 0.0, %v383
        %v388 = vsub.f32 0.0, %v384
        %v389 = vmul.f32 %v385, 1.442695
        %v390 = vpow.pop %v389
        %v391 = vmul.f32 %v386, 1.442695
        %v392 = vpow.pop %v391
        %v393 = vmul.f32 %v387, 1.442695
        %v394 = vpow.pop %v393
        %v395 = vmul.f32 %v388, 1.442695
        %v396 = vpow.pop %v395
        %v397 = vadd.f32 %v390, 1.0
        %v398 = vadd.f32 %v392, 1.0
        %v399 = vadd.f32 %v394, 1.0
        %v400 = vadd.f32 %v396, 1.0
        %v401 = vrcp.pop %v397
        %v402 = vrcp.pop %v398
        %v403 = vrcp.pop %v399
        %v404 = vrcp.pop %v400
        %v405 = vmul.f32 %v216, %v401
        %v406 = vmul.f32 %v217, %v401
        %v407 = vmul.f32 %v218, %v402
        %v408 = vmul.f32 %v219, %v402
        %v409 = vmul.f32 %v220, %v403
        %v410 = vmul.f32 %v221, %v403
        %v411 = vmul.f32 %v222, %v404
        %v412 = vmul.f32 %v223, %v404
        %v413 = vmax.f32 %v405, %v409
        %v414 = vmax.f32 %v407, %v411
        %v415 = vmax.f32 %v413, %v414
        %v416 = vrot.slane %v415, 4
        %v417 = vmax.f32 %v415, %v416
        %v418 = vrot.slane %v417, 2
        %v419 = vmax.f32 %v417, %v418
        %v420 = vrot.slane %v419, 1
        %v421 = vmax.f32 %v419, %v420
        %v422 = vmax.f32 %v406, %v410
        %v423 = vmax.f32 %v408, %v412
        %v424 = vmax.f32 %v422, %v423
        %v425 = vrot.slane %v424, 4
        %v426 = vmax.f32 %v424, %v425
        %v427 = vrot.slane %v426, 2
        %v428 = vmax.f32 %v426, %v427
        %v429 = vrot.slane %v428, 1
        %v430 = vmax.f32 %v428, %v429
        %v431 = vadd.f32 %v405, %v407
        %v432 = vadd.f32 %v431, %v409
        %v433 = vadd.f32 %v432, %v411
        %v434 = vrot.slane %v433, 4
        %v435 = vadd.f32 %v433, %v434
        %v436 = vrot.slane %v435, 2
        %v437 = vadd.f32 %v435, %v436
        %v438 = vrot.slane %v437, 1
        %v439 = vadd.f32 %v437, %v438
        %v440 = vadd.f32 %v406, %v408
        %v441 = vadd.f32 %v440, %v410
        %v442 = vadd.f32 %v441, %v412
        %v443 = vrot.slane %v442, 4
        %v444 = vadd.f32 %v442, %v443
        %v445 = vrot.slane %v444, 2
        %v446 = vadd.f32 %v444, %v445
        %v447 = vrot.slane %v446, 1
        %v448 = vadd.f32 %v446, %v447
        %v449 = vmul.f32 %v439, 0.03125
        %v450 = vmul.f32 %v448, 0.03125
        %vm451 = vcmask 1040384
        %v452 = vsel %vm451, %v421, %v449
        %v453 = vsel %vm451, %v430, %v450
        %456 = vrot.lane.b32.xlu0 %v452, 51
        %v457 = vpop.permute.xlu0 %456
        %458 = vrot.lane.b32.xlu0 %v453, 51
        %v459 = vpop.permute.xlu0 %458
        %vm460 = vcmask 416768
        %v461 = vsel %vm460, %v457, %v459
        %v465 = vsel %vm460, 0.0, %v457
        %v466 = vsel %vm460, %v459, 0.0
        %v467 = vlaneseq
        %v468 = vand.u32 %v467, 127
        %v469 = vadd.s32 %v468, 128
        %v470 = vadd.s32 %v468, 256
        %vm471 = vcmp.lt.s32.totalorder %v468, 0
        %v472 = vsub.s32 0, %v468
        %v473 = vsel %vm471, %v472, %v468
        %v474 = vshrl.u32 %v473, 4
        %v475 = vand.u32 %v473, 15
        %v476 = vsub.s32 0, %v475
        %v477 = vsel %vm471, %v476, %v475
        %vm478 = vcmp.lt.s32.totalorder %v469, 0
        %v479 = vsub.s32 0, %v469
        %v480 = vsel %vm478, %v479, %v469
        %v481 = vshrl.u32 %v480, 4
        %v482 = vand.u32 %v480, 15
        %v483 = vsub.s32 0, %v482
        %v484 = vsel %vm478, %v483, %v482
        %vm485 = vcmp.lt.s32.totalorder %v470, 0
        %v486 = vsub.s32 0, %v470
        %v487 = vsel %vm485, %v486, %v470
        %v488 = vshrl.u32 %v487, 4
        %v489 = vand.u32 %v487, 15
        %v490 = vsub.s32 0, %v489
        %v491 = vsel %vm485, %v490, %v489
        %vm492 = vcmp.ne.s32.totalorder %v477, 0
        %vm493 = vcmp.ne.s32.totalorder %v484, 0
        %vm494 = vcmp.ne.s32.totalorder %v491, 0
        %vm495 = vcmp.lt.s32.totalorder %v477, 0
        %vm496 = vcmp.lt.s32.totalorder %v484, 0
        %vm497 = vcmp.lt.s32.totalorder %v491, 0
        %vm498 = vmand %vm495, %vm492
        %vm499 = vmand %vm496, %vm493
        %vm500 = vmand %vm497, %vm494
        %v501 = vadd.s32 %v477, 16
        %v502 = vadd.s32 %v484, 16
        %v503 = vadd.s32 %v491, 16
        %v504 = vsel %vm498, %v501, %v477
        %v505 = vsel %vm499, %v502, %v484
        %v506 = vsel %vm500, %v503, %v491
        %v507 = vld [vmem:[%s3] sm:$0x3]
        %v508 = vadd.s32 %v504, 4294967293
        %v509 = vadd.s32 %v505, 4294967293
        %v510 = vadd.s32 %v506, 4294967293
        %vm511 = vcmp.ge.s32.totalorder %v508, 0
        %vm512 = vcmp.ge.s32.totalorder %v509, 0
        %vm513 = vcmp.ge.s32.totalorder %v510, 0
        %vm514 = vcmp.lt.s32.totalorder %v508, 16
        %vm515 = vcmp.lt.s32.totalorder %v509, 16
        %vm516 = vcmp.lt.s32.totalorder %v510, 16
        %vm517 = vmand %vm511, %vm514
        %vm518 = vmand %vm512, %vm515
        %vm519 = vmand %vm513, %vm516
        %v520 = vsel %vm517, 1, 0
        %v521 = vsel %vm518, 1, 0
        %v522 = vsel %vm519, 1, 0
        %vm523 = vcmp.eq.s32.totalorder %v520, 1
        %vm524 = vcmp.eq.s32.totalorder %v521, 1
        %vm525 = vcmp.eq.s32.totalorder %v522, 1
        %v526 = vsel %vm523, %v465, 0.0
        %v527 = vsel %vm524, %v461, 0.0
        %v528 = vsel %vm525, %v466, 0.0
        %530 = vset.pattern.permute.xlu0 0
        %531 = vperm.xlu0 %530, %v507
        %v532 = vpop.permute.xlu0 %531
        %v534 = vmul.f32 %v532, %v526
        %v535 = vmul.f32 %v532, %v527
        %v536 = vadd.f32 %v534, 0.0
        %v537 = vadd.f32 %v535, 0.0
        %538 = vset.pattern.permute.xlu0 7
        %539 = vperm.xlu0 %538, %v507
        %v540 = vpop.permute.xlu0 %539
        %v542 = vmul.f32 %v540, %v526
        %v543 = vmul.f32 %v540, %v527
        %v544 = vmul.f32 %v540, %v528
        %v545 = vadd.f32 %v542, 0.0
        %v546 = vadd.f32 %v543, 0.0
        %v547 = vadd.f32 %v544, 0.0
        %548 = vset.pattern.permute.xlu0 14
        %549 = vperm.xlu0 %548, %v507
        %v550 = vpop.permute.xlu0 %549
        %v552 = vmul.f32 %v550, %v526
        %v553 = vmul.f32 %v550, %v527
        %v554 = vmul.f32 %v550, %v528
        %v555 = vadd.f32 %v552, 0.0
        %v556 = vadd.f32 %v553, 0.0
        %v557 = vadd.f32 %v554, 0.0
        %558 = vset.pattern.permute.xlu0 21
        %559 = vperm.xlu0 %558, %v507
        %v560 = vpop.permute.xlu0 %559
        %v562 = vmul.f32 %v560, %v526
        %v563 = vmul.f32 %v560, %v527
        %v564 = vmul.f32 %v560, %v528
        %v565 = vadd.f32 %v562, 0.0
        %v566 = vadd.f32 %v563, 0.0
        %v567 = vadd.f32 %v564, 0.0
        %568 = vset.pattern.permute.xlu0 28
        %569 = vperm.xlu0 %568, %v507
        %v570 = vpop.permute.xlu0 %569
        %v572 = vmul.f32 %v570, %v526
        %v573 = vmul.f32 %v570, %v527
        %v574 = vmul.f32 %v570, %v528
        %578 = vrot.lane.b32.xlu0 %v572, 64
        %v579 = vpop.permute.xlu0 %578
        %580 = vrot.lane.b32.xlu0 %v573, 64
        %v581 = vpop.permute.xlu0 %580
        %582 = vrot.lane.b32.xlu0 %v574, 64
        %v583 = vpop.permute.xlu0 %582
        %vm584 = vcmask 523264
        %v585 = vsel %vm584, %v579, %v581
        %v586 = vsel %vm584, %v581, %v583
        %v589 = vadd.f32 %v536, %v585
        %v590 = vadd.f32 %v537, %v586
        %591 = vset.pattern.permute.xlu0 35
        %592 = vperm.xlu0 %591, %v507
        %v593 = vpop.permute.xlu0 %592
        %v595 = vmul.f32 %v593, %v526
        %v596 = vmul.f32 %v593, %v527
        %v597 = vmul.f32 %v593, %v528
        %601 = vrot.lane.b32.xlu0 %v595, 64
        %v602 = vpop.permute.xlu0 %601
        %603 = vrot.lane.b32.xlu0 %v596, 64
        %v604 = vpop.permute.xlu0 %603
        %605 = vrot.lane.b32.xlu0 %v597, 64
        %v606 = vpop.permute.xlu0 %605
        %v607 = vsel %vm584, %v602, %v604
        %v608 = vsel %vm584, %v604, %v606
        %v612 = vadd.f32 %v545, %v607
        %v613 = vadd.f32 %v546, %v608
        %v614 = vadd.f32 %v547, %v606
        %615 = vset.pattern.permute.xlu0 42
        %616 = vperm.xlu0 %615, %v507
        %v617 = vpop.permute.xlu0 %616
        %v619 = vmul.f32 %v617, %v526
        %v620 = vmul.f32 %v617, %v527
        %v621 = vmul.f32 %v617, %v528
        %625 = vrot.lane.b32.xlu0 %v619, 64
        %v626 = vpop.permute.xlu0 %625
        %627 = vrot.lane.b32.xlu0 %v620, 64
        %v628 = vpop.permute.xlu0 %627
        %629 = vrot.lane.b32.xlu0 %v621, 64
        %v630 = vpop.permute.xlu0 %629
        %v631 = vsel %vm584, %v626, %v628
        %v632 = vsel %vm584, %v628, %v630
        %v636 = vadd.f32 %v555, %v631
        %v637 = vadd.f32 %v556, %v632
        %v638 = vadd.f32 %v557, %v630
        %v639 = vadd.s32 %v504, 4294967294
        %v640 = vadd.s32 %v505, 4294967294
        %v641 = vadd.s32 %v506, 4294967294
        %vm642 = vcmp.ge.s32.totalorder %v639, 0
        %vm643 = vcmp.ge.s32.totalorder %v640, 0
        %vm644 = vcmp.ge.s32.totalorder %v641, 0
        %vm645 = vcmp.lt.s32.totalorder %v639, 16
        %vm646 = vcmp.lt.s32.totalorder %v640, 16
        %vm647 = vcmp.lt.s32.totalorder %v641, 16
        %vm648 = vmand %vm642, %vm645
        %vm649 = vmand %vm643, %vm646
        %vm650 = vmand %vm644, %vm647
        %v651 = vsel %vm648, 1, 0
        %v652 = vsel %vm649, 1, 0
        %v653 = vsel %vm650, 1, 0
        %vm654 = vcmp.eq.s32.totalorder %v651, 1
        %vm655 = vcmp.eq.s32.totalorder %v652, 1
        %vm656 = vcmp.eq.s32.totalorder %v653, 1
        %659 = vrot.lane.b32.xlu0 %v465, 127
        %v660 = vpop.permute.xlu0 %659
        %661 = vrot.lane.b32.xlu0 %v461, 127
        %v662 = vpop.permute.xlu0 %661
        %663 = vrot.lane.b32.xlu0 %v466, 127
        %v664 = vpop.permute.xlu0 %663
        %vm665 = vcmask 1039360
        %v666 = vsel %vm665, %v660, %v662
        %v667 = vsel %vm665, %v662, %v664
        %v671 = vsel %vm654, %v666, 0.0
        %v672 = vsel %vm655, %v667, 0.0
        %v673 = vsel %vm656, %v664, 0.0
        %674 = vset.pattern.permute.xlu0 1
        %675 = vperm.xlu0 %674, %v507
        %v676 = vpop.permute.xlu0 %675
        %v678 = vmul.f32 %v676, %v671
        %v679 = vmul.f32 %v676, %v672
        %682 = vrot.lane.b32.xlu0 %v678, 48
        %v683 = vpop.permute.xlu0 %682
        %684 = vrot.lane.b32.xlu0 %v679, 48
        %v685 = vpop.permute.xlu0 %684
        %vm686 = vcmask 392192
        %v687 = vsel %vm686, %v683, %v685
        %v691 = vadd.f32 %v565, %v683
        %v692 = vadd.f32 %v566, %v687
        %v693 = vadd.f32 %v567, %v685
        %694 = vset.pattern.permute.xlu0 8
        %695 = vperm.xlu0 %694, %v507
        %v696 = vpop.permute.xlu0 %695
        %v698 = vmul.f32 %v696, %v671
        %v699 = vmul.f32 %v696, %v672
        %v700 = vmul.f32 %v696, %v673
        %704 = vrot.lane.b32.xlu0 %v698, 112
        %v705 = vpop.permute.xlu0 %704
        %706 = vrot.lane.b32.xlu0 %v699, 112
        %v707 = vpop.permute.xlu0 %706
        %708 = vrot.lane.b32.xlu0 %v700, 112
        %v709 = vpop.permute.xlu0 %708
        %vm710 = vcmask 916480
        %v711 = vsel %vm710, %v705, %v707
        %v712 = vsel %vm710, %v707, %v709
        %v715 = vadd.f32 %v589, %v711
        %v716 = vadd.f32 %v590, %v712
        %717 = vset.pattern.permute.xlu0 15
        %718 = vperm.xlu0 %717, %v507
        %v719 = vpop.permute.xlu0 %718
        %v721 = vmul.f32 %v719, %v671
        %v722 = vmul.f32 %v719, %v672
        %v723 = vmul.f32 %v719, %v673
        %727 = vrot.lane.b32.xlu0 %v721, 112
        %v728 = vpop.permute.xlu0 %727
        %729 = vrot.lane.b32.xlu0 %v722, 112
        %v730 = vpop.permute.xlu0 %729
        %731 = vrot.lane.b32.xlu0 %v723, 112
        %v732 = vpop.permute.xlu0 %731
        %v733 = vsel %vm710, %v728, %v730
        %v734 = vsel %vm710, %v730, %v732
        %v738 = vadd.f32 %v612, %v733
        %v739 = vadd.f32 %v613, %v734
        %v740 = vadd.f32 %v614, %v732
        %741 = vset.pattern.permute.xlu0 22
        %742 = vperm.xlu0 %741, %v507
        %v743 = vpop.permute.xlu0 %742
        %v745 = vmul.f32 %v743, %v671
        %v746 = vmul.f32 %v743, %v672
        %v747 = vmul.f32 %v743, %v673
        %751 = vrot.lane.b32.xlu0 %v745, 112
        %v752 = vpop.permute.xlu0 %751
        %753 = vrot.lane.b32.xlu0 %v746, 112
        %v754 = vpop.permute.xlu0 %753
        %755 = vrot.lane.b32.xlu0 %v747, 112
        %v756 = vpop.permute.xlu0 %755
        %v757 = vsel %vm710, %v752, %v754
        %v758 = vsel %vm710, %v754, %v756
        %v762 = vadd.f32 %v636, %v757
        %v763 = vadd.f32 %v637, %v758
        %v764 = vadd.f32 %v638, %v756
        %765 = vset.pattern.permute.xlu0 29
        %766 = vperm.xlu0 %765, %v507
        %v767 = vpop.permute.xlu0 %766
        %v769 = vmul.f32 %v767, %v671
        %v770 = vmul.f32 %v767, %v672
        %v771 = vmul.f32 %v767, %v673
        %775 = vrot.lane.b32.xlu0 %v769, 112
        %v776 = vpop.permute.xlu0 %775
        %777 = vrot.lane.b32.xlu0 %v770, 112
        %v778 = vpop.permute.xlu0 %777
        %779 = vrot.lane.b32.xlu0 %v771, 112
        %v780 = vpop.permute.xlu0 %779
        %v781 = vsel %vm710, %v776, %v778
        %v782 = vsel %vm710, %v778, %v780
        %v786 = vadd.f32 %v691, %v781
        %v787 = vadd.f32 %v692, %v782
        %v788 = vadd.f32 %v693, %v780
        %789 = vset.pattern.permute.xlu0 36
        %790 = vperm.xlu0 %789, %v507
        %v791 = vpop.permute.xlu0 %790
        %v793 = vmul.f32 %v791, %v671
        %v794 = vmul.f32 %v791, %v672
        %v795 = vmul.f32 %v791, %v673
        %799 = vrot.lane.b32.xlu0 %v793, 48
        %v800 = vpop.permute.xlu0 %799
        %801 = vrot.lane.b32.xlu0 %v794, 48
        %v802 = vpop.permute.xlu0 %801
        %803 = vrot.lane.b32.xlu0 %v795, 48
        %v804 = vpop.permute.xlu0 %803
        %v805 = vsel %vm686, %v800, %v802
        %v806 = vsel %vm686, %v802, %v804
        %v809 = vadd.f32 %v715, %v805
        %v810 = vadd.f32 %v716, %v806
        %811 = vset.pattern.permute.xlu0 43
        %812 = vperm.xlu0 %811, %v507
        %v813 = vpop.permute.xlu0 %812
        %v815 = vmul.f32 %v813, %v671
        %v816 = vmul.f32 %v813, %v672
        %v817 = vmul.f32 %v813, %v673
        %821 = vrot.lane.b32.xlu0 %v815, 48
        %v822 = vpop.permute.xlu0 %821
        %823 = vrot.lane.b32.xlu0 %v816, 48
        %v824 = vpop.permute.xlu0 %823
        %825 = vrot.lane.b32.xlu0 %v817, 48
        %v826 = vpop.permute.xlu0 %825
        %v827 = vsel %vm686, %v822, %v824
        %v828 = vsel %vm686, %v824, %v826
        %v832 = vadd.f32 %v738, %v827
        %v833 = vadd.f32 %v739, %v828
        %v834 = vadd.f32 %v740, %v826
        %v835 = vadd.s32 %v504, 4294967295
        %v836 = vadd.s32 %v505, 4294967295
        %v837 = vadd.s32 %v506, 4294967295
        %vm838 = vcmp.ge.s32.totalorder %v835, 0
        %vm839 = vcmp.ge.s32.totalorder %v836, 0
        %vm840 = vcmp.ge.s32.totalorder %v837, 0
        %vm841 = vcmp.lt.s32.totalorder %v835, 16
        %vm842 = vcmp.lt.s32.totalorder %v836, 16
        %vm843 = vcmp.lt.s32.totalorder %v837, 16
        %vm844 = vmand %vm838, %vm841
        %vm845 = vmand %vm839, %vm842
        %vm846 = vmand %vm840, %vm843
        %v847 = vsel %vm844, 1, 0
        %v848 = vsel %vm845, 1, 0
        %v849 = vsel %vm846, 1, 0
        %vm850 = vcmp.eq.s32.totalorder %v847, 1
        %vm851 = vcmp.eq.s32.totalorder %v848, 1
        %vm852 = vcmp.eq.s32.totalorder %v849, 1
        %853 = vrot.lane.b32.xlu0 %v465, 126
        %v854 = vpop.permute.xlu0 %853
        %855 = vrot.lane.b32.xlu0 %v461, 126
        %v856 = vpop.permute.xlu0 %855
        %857 = vrot.lane.b32.xlu0 %v466, 126
        %v858 = vpop.permute.xlu0 %857
        %vm859 = vcmask 1031168
        %v860 = vsel %vm859, %v854, %v856
        %v861 = vsel %vm859, %v856, %v858
        %v865 = vsel %vm850, %v860, 0.0
        %v866 = vsel %vm851, %v861, 0.0
        %v867 = vsel %vm852, %v858, 0.0
        %868 = vset.pattern.permute.xlu0 2
        %869 = vperm.xlu0 %868, %v507
        %v870 = vpop.permute.xlu0 %869
        %v872 = vmul.f32 %v870, %v865
        %v873 = vmul.f32 %v870, %v866
        %876 = vrot.lane.b32.xlu0 %v872, 32
        %v877 = vpop.permute.xlu0 %876
        %878 = vrot.lane.b32.xlu0 %v873, 32
        %v879 = vpop.permute.xlu0 %878
        %vm880 = vcmask 261120
        %v881 = vsel %vm880, %v877, %v879
        %v885 = vadd.f32 %v762, %v877
        %v886 = vadd.f32 %v763, %v881
        %v887 = vadd.f32 %v764, %v879
        %888 = vset.pattern.permute.xlu0 9
        %889 = vperm.xlu0 %888, %v507
        %v890 = vpop.permute.xlu0 %889
        %v892 = vmul.f32 %v890, %v865
        %v893 = vmul.f32 %v890, %v866
        %v894 = vmul.f32 %v890, %v867
        %898 = vrot.lane.b32.xlu0 %v892, 32
        %v899 = vpop.permute.xlu0 %898
        %900 = vrot.lane.b32.xlu0 %v893, 32
        %v901 = vpop.permute.xlu0 %900
        %902 = vrot.lane.b32.xlu0 %v894, 32
        %v903 = vpop.permute.xlu0 %902
        %v904 = vsel %vm880, %v899, %v901
        %v905 = vsel %vm880, %v901, %v903
        %v909 = vadd.f32 %v786, %v899
        %v910 = vadd.f32 %v787, %v904
        %v911 = vadd.f32 %v788, %v905
        %912 = vset.pattern.permute.xlu0 16
        %913 = vperm.xlu0 %912, %v507
        %v914 = vpop.permute.xlu0 %913
        %v916 = vmul.f32 %v914, %v865
        %v917 = vmul.f32 %v914, %v866
        %v918 = vmul.f32 %v914, %v867
        %922 = vrot.lane.b32.xlu0 %v916, 96
        %v923 = vpop.permute.xlu0 %922
        %924 = vrot.lane.b32.xlu0 %v917, 96
        %v925 = vpop.permute.xlu0 %924
        %926 = vrot.lane.b32.xlu0 %v918, 96
        %v927 = vpop.permute.xlu0 %926
        %vm928 = vcmask 785408
        %v929 = vsel %vm928, %v923, %v925
        %v930 = vsel %vm928, %v925, %v927
        %v933 = vadd.f32 %v809, %v929
        %v934 = vadd.f32 %v810, %v930
        %935 = vset.pattern.permute.xlu0 23
        %936 = vperm.xlu0 %935, %v507
        %v937 = vpop.permute.xlu0 %936
        %v939 = vmul.f32 %v937, %v865
        %v940 = vmul.f32 %v937, %v866
        %v941 = vmul.f32 %v937, %v867
        %945 = vrot.lane.b32.xlu0 %v939, 96
        %v946 = vpop.permute.xlu0 %945
        %947 = vrot.lane.b32.xlu0 %v940, 96
        %v948 = vpop.permute.xlu0 %947
        %949 = vrot.lane.b32.xlu0 %v941, 96
        %v950 = vpop.permute.xlu0 %949
        %v951 = vsel %vm928, %v946, %v948
        %v952 = vsel %vm928, %v948, %v950
        %v956 = vadd.f32 %v832, %v951
        %v957 = vadd.f32 %v833, %v952
        %v958 = vadd.f32 %v834, %v950
        %959 = vset.pattern.permute.xlu0 30
        %960 = vperm.xlu0 %959, %v507
        %v961 = vpop.permute.xlu0 %960
        %v963 = vmul.f32 %v961, %v865
        %v964 = vmul.f32 %v961, %v866
        %v965 = vmul.f32 %v961, %v867
        %969 = vrot.lane.b32.xlu0 %v963, 96
        %v970 = vpop.permute.xlu0 %969
        %971 = vrot.lane.b32.xlu0 %v964, 96
        %v972 = vpop.permute.xlu0 %971
        %973 = vrot.lane.b32.xlu0 %v965, 96
        %v974 = vpop.permute.xlu0 %973
        %v975 = vsel %vm928, %v970, %v972
        %v976 = vsel %vm928, %v972, %v974
        %v980 = vadd.f32 %v885, %v975
        %v981 = vadd.f32 %v886, %v976
        %v982 = vadd.f32 %v887, %v974
        %983 = vset.pattern.permute.xlu0 37
        %984 = vperm.xlu0 %983, %v507
        %v985 = vpop.permute.xlu0 %984
        %v987 = vmul.f32 %v985, %v865
        %v988 = vmul.f32 %v985, %v866
        %v989 = vmul.f32 %v985, %v867
        %993 = vrot.lane.b32.xlu0 %v987, 96
        %v994 = vpop.permute.xlu0 %993
        %995 = vrot.lane.b32.xlu0 %v988, 96
        %v996 = vpop.permute.xlu0 %995
        %997 = vrot.lane.b32.xlu0 %v989, 96
        %v998 = vpop.permute.xlu0 %997
        %v999 = vsel %vm928, %v994, %v996
        %v1000 = vsel %vm928, %v996, %v998
        %v1004 = vadd.f32 %v909, %v999
        %v1005 = vadd.f32 %v910, %v1000
        %v1006 = vadd.f32 %v911, %v998
        %1007 = vset.pattern.permute.xlu0 44
        %1008 = vperm.xlu0 %1007, %v507
        %v1009 = vpop.permute.xlu0 %1008
        %v1011 = vmul.f32 %v1009, %v865
        %v1012 = vmul.f32 %v1009, %v866
        %v1013 = vmul.f32 %v1009, %v867
        %1017 = vrot.lane.b32.xlu0 %v1011, 32
        %v1018 = vpop.permute.xlu0 %1017
        %1019 = vrot.lane.b32.xlu0 %v1012, 32
        %v1020 = vpop.permute.xlu0 %1019
        %1021 = vrot.lane.b32.xlu0 %v1013, 32
        %v1022 = vpop.permute.xlu0 %1021
        %v1023 = vsel %vm880, %v1018, %v1020
        %v1024 = vsel %vm880, %v1020, %v1022
        %v1027 = vadd.f32 %v933, %v1023
        %v1028 = vadd.f32 %v934, %v1024
        %1029 = vset.pattern.permute.xlu0 3
        %1030 = vperm.xlu0 %1029, %v507
        %v1031 = vpop.permute.xlu0 %1030
        %v1033 = vmul.f32 %v1031, %v465
        %v1034 = vmul.f32 %v1031, %v461
        %v1035 = vmul.f32 %v1031, %v466
        %1039 = vrot.lane.b32.xlu0 %v1033, 13
        %v1040 = vpop.permute.xlu0 %1039
        %1041 = vrot.lane.b32.xlu0 %v1034, 13
        %v1042 = vpop.permute.xlu0 %1041
        %1043 = vrot.lane.b32.xlu0 %v1035, 13
        %v1044 = vpop.permute.xlu0 %1043
        %vm1045 = vcmask 105472
        %v1046 = vsel %vm1045, %v1040, %v1042
        %v1047 = vsel %vm1045, %v1042, %v1044
        %v1051 = vadd.f32 %v956, %v1040
        %v1052 = vadd.f32 %v957, %v1046
        %v1053 = vadd.f32 %v958, %v1047
        %1054 = vset.pattern.permute.xlu0 10
        %1055 = vperm.xlu0 %1054, %v507
        %v1056 = vpop.permute.xlu0 %1055
        %v1058 = vmul.f32 %v1056, %v465
        %v1059 = vmul.f32 %v1056, %v461
        %v1060 = vmul.f32 %v1056, %v466
        %1064 = vrot.lane.b32.xlu0 %v1058, 13
        %v1065 = vpop.permute.xlu0 %1064
        %1066 = vrot.lane.b32.xlu0 %v1059, 13
        %v1067 = vpop.permute.xlu0 %1066
        %1068 = vrot.lane.b32.xlu0 %v1060, 13
        %v1069 = vpop.permute.xlu0 %1068
        %v1070 = vsel %vm1045, %v1065, %v1067
        %v1071 = vsel %vm1045, %v1067, %v1069
        %v1075 = vadd.f32 %v980, %v1065
        %v1076 = vadd.f32 %v981, %v1070
        %v1077 = vadd.f32 %v982, %v1071
        %1078 = vset.pattern.permute.xlu0 17
        %1079 = vperm.xlu0 %1078, %v507
        %v1080 = vpop.permute.xlu0 %1079
        %v1082 = vmul.f32 %v1080, %v465
        %v1083 = vmul.f32 %v1080, %v461
        %v1084 = vmul.f32 %v1080, %v466
        %1088 = vrot.lane.b32.xlu0 %v1082, 13
        %v1089 = vpop.permute.xlu0 %1088
        %1090 = vrot.lane.b32.xlu0 %v1083, 13
        %v1091 = vpop.permute.xlu0 %1090
        %1092 = vrot.lane.b32.xlu0 %v1084, 13
        %v1093 = vpop.permute.xlu0 %1092
        %v1094 = vsel %vm1045, %v1089, %v1091
        %v1095 = vsel %vm1045, %v1091, %v1093
        %v1099 = vadd.f32 %v1004, %v1089
        %v1100 = vadd.f32 %v1005, %v1094
        %v1101 = vadd.f32 %v1006, %v1095
        %1102 = vset.pattern.permute.xlu0 24
        %1103 = vperm.xlu0 %1102, %v507
        %v1104 = vpop.permute.xlu0 %1103
        %v1106 = vmul.f32 %v1104, %v465
        %v1107 = vmul.f32 %v1104, %v461
        %v1108 = vmul.f32 %v1104, %v466
        %1112 = vrot.lane.b32.xlu0 %v1106, 77
        %v1113 = vpop.permute.xlu0 %1112
        %1114 = vrot.lane.b32.xlu0 %v1107, 77
        %v1115 = vpop.permute.xlu0 %1114
        %1116 = vrot.lane.b32.xlu0 %v1108, 77
        %v1117 = vpop.permute.xlu0 %1116
        %vm1118 = vcmask 629760
        %v1119 = vsel %vm1118, %v1113, %v1115
        %v1120 = vsel %vm1118, %v1115, %v1117
        %v1123 = vadd.f32 %v1027, %v1119
        %v1124 = vadd.f32 %v1028, %v1120
        %1125 = vset.pattern.permute.xlu0 31
        %1126 = vperm.xlu0 %1125, %v507
        %v1127 = vpop.permute.xlu0 %1126
        %v1129 = vmul.f32 %v1127, %v465
        %v1130 = vmul.f32 %v1127, %v461
        %v1131 = vmul.f32 %v1127, %v466
        %1135 = vrot.lane.b32.xlu0 %v1129, 77
        %v1136 = vpop.permute.xlu0 %1135
        %1137 = vrot.lane.b32.xlu0 %v1130, 77
        %v1138 = vpop.permute.xlu0 %1137
        %1139 = vrot.lane.b32.xlu0 %v1131, 77
        %v1140 = vpop.permute.xlu0 %1139
        %v1141 = vsel %vm1118, %v1136, %v1138
        %v1142 = vsel %vm1118, %v1138, %v1140
        %v1146 = vadd.f32 %v1051, %v1141
        %v1147 = vadd.f32 %v1052, %v1142
        %v1148 = vadd.f32 %v1053, %v1140
        %1149 = vset.pattern.permute.xlu0 38
        %1150 = vperm.xlu0 %1149, %v507
        %v1151 = vpop.permute.xlu0 %1150
        %v1153 = vmul.f32 %v1151, %v465
        %v1154 = vmul.f32 %v1151, %v461
        %v1155 = vmul.f32 %v1151, %v466
        %1159 = vrot.lane.b32.xlu0 %v1153, 77
        %v1160 = vpop.permute.xlu0 %1159
        %1161 = vrot.lane.b32.xlu0 %v1154, 77
        %v1162 = vpop.permute.xlu0 %1161
        %1163 = vrot.lane.b32.xlu0 %v1155, 77
        %v1164 = vpop.permute.xlu0 %1163
        %v1165 = vsel %vm1118, %v1160, %v1162
        %v1166 = vsel %vm1118, %v1162, %v1164
        %v1170 = vadd.f32 %v1075, %v1165
        %v1171 = vadd.f32 %v1076, %v1166
        %v1172 = vadd.f32 %v1077, %v1164
        %1173 = vset.pattern.permute.xlu0 45
        %1174 = vperm.xlu0 %1173, %v507
        %v1175 = vpop.permute.xlu0 %1174
        %v1177 = vmul.f32 %v1175, %v465
        %v1178 = vmul.f32 %v1175, %v461
        %v1179 = vmul.f32 %v1175, %v466
        %1183 = vrot.lane.b32.xlu0 %v1177, 77
        %v1184 = vpop.permute.xlu0 %1183
        %1185 = vrot.lane.b32.xlu0 %v1178, 77
        %v1186 = vpop.permute.xlu0 %1185
        %1187 = vrot.lane.b32.xlu0 %v1179, 77
        %v1188 = vpop.permute.xlu0 %1187
        %v1189 = vsel %vm1118, %v1184, %v1186
        %v1190 = vsel %vm1118, %v1186, %v1188
        %v1194 = vadd.f32 %v1099, %v1189
        %v1195 = vadd.f32 %v1100, %v1190
        %v1196 = vadd.f32 %v1101, %v1188
        %v1197 = vadd.s32 %v504, 1
        %v1198 = vadd.s32 %v505, 1
        %v1199 = vadd.s32 %v506, 1
        %vm1200 = vcmp.ge.s32.totalorder %v1197, 0
        %vm1201 = vcmp.ge.s32.totalorder %v1198, 0
        %vm1202 = vcmp.ge.s32.totalorder %v1199, 0
        %vm1203 = vcmp.lt.s32.totalorder %v1197, 16
        %vm1204 = vcmp.lt.s32.totalorder %v1198, 16
        %vm1205 = vcmp.lt.s32.totalorder %v1199, 16
        %vm1206 = vmand %vm1200, %vm1203
        %vm1207 = vmand %vm1201, %vm1204
        %vm1208 = vmand %vm1202, %vm1205
        %v1209 = vsel %vm1206, 1, 0
        %v1210 = vsel %vm1207, 1, 0
        %v1211 = vsel %vm1208, 1, 0
        %vm1212 = vcmp.eq.s32.totalorder %v1209, 1
        %vm1213 = vcmp.eq.s32.totalorder %v1210, 1
        %vm1214 = vcmp.eq.s32.totalorder %v1211, 1
        %1215 = vrot.lane.b32.xlu0 %v465, 124
        %v1216 = vpop.permute.xlu0 %1215
        %1217 = vrot.lane.b32.xlu0 %v461, 124
        %v1218 = vpop.permute.xlu0 %1217
        %1219 = vrot.lane.b32.xlu0 %v466, 124
        %v1220 = vpop.permute.xlu0 %1219
        %vm1221 = vcmask 1014784
        %v1222 = vsel %vm1221, %v1216, %v1218
        %v1223 = vsel %vm1221, %v1218, %v1220
        %v1227 = vsel %vm1212, %v1222, 0.0
        %v1228 = vsel %vm1213, %v1223, 0.0
        %v1229 = vsel %vm1214, %v1220, 0.0
        %1230 = vset.pattern.permute.xlu0 4
        %1231 = vperm.xlu0 %1230, %v507
        %v1232 = vpop.permute.xlu0 %1231
        %v1234 = vmul.f32 %v1232, %v1227
        %v1235 = vmul.f32 %v1232, %v1228
        %v1236 = vadd.f32 %v1123, %v1234
        %v1237 = vadd.f32 %v1124, %v1235
        %1238 = vset.pattern.permute.xlu0 11
        %1239 = vperm.xlu0 %1238, %v507
        %v1240 = vpop.permute.xlu0 %1239
        %v1242 = vmul.f32 %v1240, %v1227
        %v1243 = vmul.f32 %v1240, %v1228
        %v1244 = vmul.f32 %v1240, %v1229
        %v1245 = vadd.f32 %v1146, %v1242
        %v1246 = vadd.f32 %v1147, %v1243
        %v1247 = vadd.f32 %v1148, %v1244
        %1248 = vset.pattern.permute.xlu0 18
        %1249 = vperm.xlu0 %1248, %v507
        %v1250 = vpop.permute.xlu0 %1249
        %v1252 = vmul.f32 %v1250, %v1227
        %v1253 = vmul.f32 %v1250, %v1228
        %v1254 = vmul.f32 %v1250, %v1229
        %v1255 = vadd.f32 %v1170, %v1252
        %v1256 = vadd.f32 %v1171, %v1253
        %v1257 = vadd.f32 %v1172, %v1254
        %1258 = vset.pattern.permute.xlu0 25
        %1259 = vperm.xlu0 %1258, %v507
        %v1260 = vpop.permute.xlu0 %1259
        %v1262 = vmul.f32 %v1260, %v1227
        %v1263 = vmul.f32 %v1260, %v1228
        %v1264 = vmul.f32 %v1260, %v1229
        %v1265 = vadd.f32 %v1194, %v1262
        %v1266 = vadd.f32 %v1195, %v1263
        %v1267 = vadd.f32 %v1196, %v1264
        %1268 = vset.pattern.permute.xlu0 32
        %1269 = vperm.xlu0 %1268, %v507
        %v1270 = vpop.permute.xlu0 %1269
        %v1272 = vmul.f32 %v1270, %v1227
        %v1273 = vmul.f32 %v1270, %v1228
        %v1274 = vmul.f32 %v1270, %v1229
        %1278 = vrot.lane.b32.xlu0 %v1272, 64
        %v1279 = vpop.permute.xlu0 %1278
        %1280 = vrot.lane.b32.xlu0 %v1273, 64
        %v1281 = vpop.permute.xlu0 %1280
        %1282 = vrot.lane.b32.xlu0 %v1274, 64
        %v1283 = vpop.permute.xlu0 %1282
        %v1284 = vsel %vm584, %v1279, %v1281
        %v1285 = vsel %vm584, %v1281, %v1283
        %v1288 = vadd.f32 %v1236, %v1284
        %v1289 = vadd.f32 %v1237, %v1285
        %1290 = vset.pattern.permute.xlu0 39
        %1291 = vperm.xlu0 %1290, %v507
        %v1292 = vpop.permute.xlu0 %1291
        %v1294 = vmul.f32 %v1292, %v1227
        %v1295 = vmul.f32 %v1292, %v1228
        %v1296 = vmul.f32 %v1292, %v1229
        %1300 = vrot.lane.b32.xlu0 %v1294, 64
        %v1301 = vpop.permute.xlu0 %1300
        %1302 = vrot.lane.b32.xlu0 %v1295, 64
        %v1303 = vpop.permute.xlu0 %1302
        %1304 = vrot.lane.b32.xlu0 %v1296, 64
        %v1305 = vpop.permute.xlu0 %1304
        %v1306 = vsel %vm584, %v1301, %v1303
        %v1307 = vsel %vm584, %v1303, %v1305
        %v1311 = vadd.f32 %v1245, %v1306
        %v1312 = vadd.f32 %v1246, %v1307
        %v1313 = vadd.f32 %v1247, %v1305
        %1314 = vset.pattern.permute.xlu0 46
        %1315 = vperm.xlu0 %1314, %v507
        %v1316 = vpop.permute.xlu0 %1315
        %v1318 = vmul.f32 %v1316, %v1227
        %v1319 = vmul.f32 %v1316, %v1228
        %v1320 = vmul.f32 %v1316, %v1229
        %1324 = vrot.lane.b32.xlu0 %v1318, 64
        %v1325 = vpop.permute.xlu0 %1324
        %1326 = vrot.lane.b32.xlu0 %v1319, 64
        %v1327 = vpop.permute.xlu0 %1326
        %1328 = vrot.lane.b32.xlu0 %v1320, 64
        %v1329 = vpop.permute.xlu0 %1328
        %v1330 = vsel %vm584, %v1325, %v1327
        %v1331 = vsel %vm584, %v1327, %v1329
        %v1335 = vadd.f32 %v1255, %v1330
        %v1336 = vadd.f32 %v1256, %v1331
        %v1337 = vadd.f32 %v1257, %v1329
        %v1338 = vadd.s32 %v504, 2
        %v1339 = vadd.s32 %v505, 2
        %v1340 = vadd.s32 %v506, 2
        %vm1341 = vcmp.ge.s32.totalorder %v1338, 0
        %vm1342 = vcmp.ge.s32.totalorder %v1339, 0
        %vm1343 = vcmp.ge.s32.totalorder %v1340, 0
        %vm1344 = vcmp.lt.s32.totalorder %v1338, 16
        %vm1345 = vcmp.lt.s32.totalorder %v1339, 16
        %vm1346 = vcmp.lt.s32.totalorder %v1340, 16
        %vm1347 = vmand %vm1341, %vm1344
        %vm1348 = vmand %vm1342, %vm1345
        %vm1349 = vmand %vm1343, %vm1346
        %v1350 = vsel %vm1347, 1, 0
        %v1351 = vsel %vm1348, 1, 0
        %v1352 = vsel %vm1349, 1, 0
        %vm1353 = vcmp.eq.s32.totalorder %v1350, 1
        %vm1354 = vcmp.eq.s32.totalorder %v1351, 1
        %vm1355 = vcmp.eq.s32.totalorder %v1352, 1
        %1356 = vrot.lane.b32.xlu0 %v465, 123
        %v1357 = vpop.permute.xlu0 %1356
        %1358 = vrot.lane.b32.xlu0 %v461, 123
        %v1359 = vpop.permute.xlu0 %1358
        %1360 = vrot.lane.b32.xlu0 %v466, 123
        %v1361 = vpop.permute.xlu0 %1360
        %vm1362 = vcmask 1006592
        %v1363 = vsel %vm1362, %v1357, %v1359
        %v1364 = vsel %vm1362, %v1359, %v1361
        %v1368 = vsel %vm1353, %v1363, 0.0
        %v1369 = vsel %vm1354, %v1364, 0.0
        %v1370 = vsel %vm1355, %v1361, 0.0
        %1371 = vset.pattern.permute.xlu0 5
        %1372 = vperm.xlu0 %1371, %v507
        %v1373 = vpop.permute.xlu0 %1372
        %v1375 = vmul.f32 %v1373, %v1368
        %v1376 = vmul.f32 %v1373, %v1369
        %1379 = vrot.lane.b32.xlu0 %v1375, 48
        %v1380 = vpop.permute.xlu0 %1379
        %1381 = vrot.lane.b32.xlu0 %v1376, 48
        %v1382 = vpop.permute.xlu0 %1381
        %v1383 = vsel %vm686, %v1380, %v1382
        %v1387 = vadd.f32 %v1265, %v1380
        %v1388 = vadd.f32 %v1266, %v1383
        %v1389 = vadd.f32 %v1267, %v1382
        %1390 = vset.pattern.permute.xlu0 12
        %1391 = vperm.xlu0 %1390, %v507
        %v1392 = vpop.permute.xlu0 %1391
        %v1394 = vmul.f32 %v1392, %v1368
        %v1395 = vmul.f32 %v1392, %v1369
        %v1396 = vmul.f32 %v1392, %v1370
        %1400 = vrot.lane.b32.xlu0 %v1394, 112
        %v1401 = vpop.permute.xlu0 %1400
        %1402 = vrot.lane.b32.xlu0 %v1395, 112
        %v1403 = vpop.permute.xlu0 %1402
        %1404 = vrot.lane.b32.xlu0 %v1396, 112
        %v1405 = vpop.permute.xlu0 %1404
        %v1406 = vsel %vm710, %v1401, %v1403
        %v1407 = vsel %vm710, %v1403, %v1405
        %v1410 = vadd.f32 %v1288, %v1406
        %v1411 = vadd.f32 %v1289, %v1407
        %1412 = vset.pattern.permute.xlu0 19
        %1413 = vperm.xlu0 %1412, %v507
        %v1414 = vpop.permute.xlu0 %1413
        %v1416 = vmul.f32 %v1414, %v1368
        %v1417 = vmul.f32 %v1414, %v1369
        %v1418 = vmul.f32 %v1414, %v1370
        %1422 = vrot.lane.b32.xlu0 %v1416, 112
        %v1423 = vpop.permute.xlu0 %1422
        %1424 = vrot.lane.b32.xlu0 %v1417, 112
        %v1425 = vpop.permute.xlu0 %1424
        %1426 = vrot.lane.b32.xlu0 %v1418, 112
        %v1427 = vpop.permute.xlu0 %1426
        %v1428 = vsel %vm710, %v1423, %v1425
        %v1429 = vsel %vm710, %v1425, %v1427
        %v1433 = vadd.f32 %v1311, %v1428
        %v1434 = vadd.f32 %v1312, %v1429
        %v1435 = vadd.f32 %v1313, %v1427
        %1436 = vset.pattern.permute.xlu0 26
        %1437 = vperm.xlu0 %1436, %v507
        %v1438 = vpop.permute.xlu0 %1437
        %v1440 = vmul.f32 %v1438, %v1368
        %v1441 = vmul.f32 %v1438, %v1369
        %v1442 = vmul.f32 %v1438, %v1370
        %1446 = vrot.lane.b32.xlu0 %v1440, 112
        %v1447 = vpop.permute.xlu0 %1446
        %1448 = vrot.lane.b32.xlu0 %v1441, 112
        %v1449 = vpop.permute.xlu0 %1448
        %1450 = vrot.lane.b32.xlu0 %v1442, 112
        %v1451 = vpop.permute.xlu0 %1450
        %v1452 = vsel %vm710, %v1447, %v1449
        %v1453 = vsel %vm710, %v1449, %v1451
        %v1457 = vadd.f32 %v1335, %v1452
        %v1458 = vadd.f32 %v1336, %v1453
        %v1459 = vadd.f32 %v1337, %v1451
        %1460 = vset.pattern.permute.xlu0 33
        %1461 = vperm.xlu0 %1460, %v507
        %v1462 = vpop.permute.xlu0 %1461
        %v1464 = vmul.f32 %v1462, %v1368
        %v1465 = vmul.f32 %v1462, %v1369
        %v1466 = vmul.f32 %v1462, %v1370
        %1470 = vrot.lane.b32.xlu0 %v1464, 112
        %v1471 = vpop.permute.xlu0 %1470
        %1472 = vrot.lane.b32.xlu0 %v1465, 112
        %v1473 = vpop.permute.xlu0 %1472
        %1474 = vrot.lane.b32.xlu0 %v1466, 112
        %v1475 = vpop.permute.xlu0 %1474
        %v1476 = vsel %vm710, %v1471, %v1473
        %v1477 = vsel %vm710, %v1473, %v1475
        %v1481 = vadd.f32 %v1387, %v1476
        %v1482 = vadd.f32 %v1388, %v1477
        %v1483 = vadd.f32 %v1389, %v1475
        %1484 = vset.pattern.permute.xlu0 40
        %1485 = vperm.xlu0 %1484, %v507
        %v1486 = vpop.permute.xlu0 %1485
        %v1488 = vmul.f32 %v1486, %v1368
        %v1489 = vmul.f32 %v1486, %v1369
        %v1490 = vmul.f32 %v1486, %v1370
        %1494 = vrot.lane.b32.xlu0 %v1488, 48
        %v1495 = vpop.permute.xlu0 %1494
        %1496 = vrot.lane.b32.xlu0 %v1489, 48
        %v1497 = vpop.permute.xlu0 %1496
        %1498 = vrot.lane.b32.xlu0 %v1490, 48
        %v1499 = vpop.permute.xlu0 %1498
        %v1500 = vsel %vm686, %v1495, %v1497
        %v1501 = vsel %vm686, %v1497, %v1499
        %v1504 = vadd.f32 %v1410, %v1500
        %v1505 = vadd.f32 %v1411, %v1501
        %1506 = vset.pattern.permute.xlu0 47
        %1507 = vperm.xlu0 %1506, %v507
        %v1508 = vpop.permute.xlu0 %1507
        %v1510 = vmul.f32 %v1508, %v1368
        %v1511 = vmul.f32 %v1508, %v1369
        %v1512 = vmul.f32 %v1508, %v1370
        %1516 = vrot.lane.b32.xlu0 %v1510, 48
        %v1517 = vpop.permute.xlu0 %1516
        %1518 = vrot.lane.b32.xlu0 %v1511, 48
        %v1519 = vpop.permute.xlu0 %1518
        %1520 = vrot.lane.b32.xlu0 %v1512, 48
        %v1521 = vpop.permute.xlu0 %1520
        %v1522 = vsel %vm686, %v1517, %v1519
        %v1523 = vsel %vm686, %v1519, %v1521
        %v1527 = vadd.f32 %v1433, %v1522
        %v1528 = vadd.f32 %v1434, %v1523
        %v1529 = vadd.f32 %v1435, %v1521
        %v1530 = vadd.s32 %v504, 3
        %v1531 = vadd.s32 %v505, 3
        %v1532 = vadd.s32 %v506, 3
        %vm1533 = vcmp.ge.s32.totalorder %v1530, 0
        %vm1534 = vcmp.ge.s32.totalorder %v1531, 0
        %vm1535 = vcmp.ge.s32.totalorder %v1532, 0
        %vm1536 = vcmp.lt.s32.totalorder %v1530, 16
        %vm1537 = vcmp.lt.s32.totalorder %v1531, 16
        %vm1538 = vcmp.lt.s32.totalorder %v1532, 16
        %vm1539 = vmand %vm1533, %vm1536
        %vm1540 = vmand %vm1534, %vm1537
        %vm1541 = vmand %vm1535, %vm1538
        %v1542 = vsel %vm1539, 1, 0
        %v1543 = vsel %vm1540, 1, 0
        %v1544 = vsel %vm1541, 1, 0
        %vm1545 = vcmp.eq.s32.totalorder %v1542, 1
        %vm1546 = vcmp.eq.s32.totalorder %v1543, 1
        %vm1547 = vcmp.eq.s32.totalorder %v1544, 1
        %1548 = vrot.lane.b32.xlu0 %v465, 122
        %v1549 = vpop.permute.xlu0 %1548
        %1550 = vrot.lane.b32.xlu0 %v461, 122
        %v1551 = vpop.permute.xlu0 %1550
        %1552 = vrot.lane.b32.xlu0 %v466, 122
        %v1553 = vpop.permute.xlu0 %1552
        %vm1554 = vcmask 998400
        %v1555 = vsel %vm1554, %v1549, %v1551
        %v1556 = vsel %vm1554, %v1551, %v1553
        %v1560 = vsel %vm1545, %v1555, 0.0
        %v1561 = vsel %vm1546, %v1556, 0.0
        %v1562 = vsel %vm1547, %v1553, 0.0
        %1563 = vset.pattern.permute.xlu0 6
        %1564 = vperm.xlu0 %1563, %v507
        %v1565 = vpop.permute.xlu0 %1564
        %v1567 = vmul.f32 %v1565, %v1560
        %v1568 = vmul.f32 %v1565, %v1561
        %1571 = vrot.lane.b32.xlu0 %v1567, 32
        %v1572 = vpop.permute.xlu0 %1571
        %1573 = vrot.lane.b32.xlu0 %v1568, 32
        %v1574 = vpop.permute.xlu0 %1573
        %v1575 = vsel %vm880, %v1572, %v1574
        %v1579 = vadd.f32 %v1457, %v1572
        %v1580 = vadd.f32 %v1458, %v1575
        %v1581 = vadd.f32 %v1459, %v1574
        %1582 = vset.pattern.permute.xlu0 13
        %1583 = vperm.xlu0 %1582, %v507
        %v1584 = vpop.permute.xlu0 %1583
        %v1586 = vmul.f32 %v1584, %v1560
        %v1587 = vmul.f32 %v1584, %v1561
        %v1588 = vmul.f32 %v1584, %v1562
        %1592 = vrot.lane.b32.xlu0 %v1586, 32
        %v1593 = vpop.permute.xlu0 %1592
        %1594 = vrot.lane.b32.xlu0 %v1587, 32
        %v1595 = vpop.permute.xlu0 %1594
        %1596 = vrot.lane.b32.xlu0 %v1588, 32
        %v1597 = vpop.permute.xlu0 %1596
        %v1598 = vsel %vm880, %v1593, %v1595
        %v1599 = vsel %vm880, %v1595, %v1597
        %v1603 = vadd.f32 %v1481, %v1593
        %v1604 = vadd.f32 %v1482, %v1598
        %v1605 = vadd.f32 %v1483, %v1599
        %1606 = vset.pattern.permute.xlu0 20
        %1607 = vperm.xlu0 %1606, %v507
        %v1608 = vpop.permute.xlu0 %1607
        %v1610 = vmul.f32 %v1608, %v1560
        %v1611 = vmul.f32 %v1608, %v1561
        %v1612 = vmul.f32 %v1608, %v1562
        %1616 = vrot.lane.b32.xlu0 %v1610, 96
        %v1617 = vpop.permute.xlu0 %1616
        %1618 = vrot.lane.b32.xlu0 %v1611, 96
        %v1619 = vpop.permute.xlu0 %1618
        %1620 = vrot.lane.b32.xlu0 %v1612, 96
        %v1621 = vpop.permute.xlu0 %1620
        %v1622 = vsel %vm928, %v1617, %v1619
        %v1623 = vsel %vm928, %v1619, %v1621
        %v1626 = vadd.f32 %v1504, %v1622
        %v1627 = vadd.f32 %v1505, %v1623
        %1628 = vset.pattern.permute.xlu0 27
        %1629 = vperm.xlu0 %1628, %v507
        %v1630 = vpop.permute.xlu0 %1629
        %v1632 = vmul.f32 %v1630, %v1560
        %v1633 = vmul.f32 %v1630, %v1561
        %v1634 = vmul.f32 %v1630, %v1562
        %1638 = vrot.lane.b32.xlu0 %v1632, 96
        %v1639 = vpop.permute.xlu0 %1638
        %1640 = vrot.lane.b32.xlu0 %v1633, 96
        %v1641 = vpop.permute.xlu0 %1640
        %1642 = vrot.lane.b32.xlu0 %v1634, 96
        %v1643 = vpop.permute.xlu0 %1642
        %v1644 = vsel %vm928, %v1639, %v1641
        %v1645 = vsel %vm928, %v1641, %v1643
        %v1649 = vadd.f32 %v1527, %v1644
        %v1650 = vadd.f32 %v1528, %v1645
        %v1651 = vadd.f32 %v1529, %v1643
        %1652 = vset.pattern.permute.xlu0 34
        %1653 = vperm.xlu0 %1652, %v507
        %v1654 = vpop.permute.xlu0 %1653
        %v1656 = vmul.f32 %v1654, %v1560
        %v1657 = vmul.f32 %v1654, %v1561
        %v1658 = vmul.f32 %v1654, %v1562
        %1662 = vrot.lane.b32.xlu0 %v1656, 96
        %v1663 = vpop.permute.xlu0 %1662
        %1664 = vrot.lane.b32.xlu0 %v1657, 96
        %v1665 = vpop.permute.xlu0 %1664
        %1666 = vrot.lane.b32.xlu0 %v1658, 96
        %v1667 = vpop.permute.xlu0 %1666
        %v1668 = vsel %vm928, %v1663, %v1665
        %v1669 = vsel %vm928, %v1665, %v1667
        %v1673 = vadd.f32 %v1579, %v1668
        %v1674 = vadd.f32 %v1580, %v1669
        %v1675 = vadd.f32 %v1581, %v1667
        %1676 = vset.pattern.permute.xlu0 41
        %1677 = vperm.xlu0 %1676, %v507
        %v1678 = vpop.permute.xlu0 %1677
        %v1680 = vmul.f32 %v1678, %v1560
        %v1681 = vmul.f32 %v1678, %v1561
        %v1682 = vmul.f32 %v1678, %v1562
        %1686 = vrot.lane.b32.xlu0 %v1680, 96
        %v1687 = vpop.permute.xlu0 %1686
        %1688 = vrot.lane.b32.xlu0 %v1681, 96
        %v1689 = vpop.permute.xlu0 %1688
        %1690 = vrot.lane.b32.xlu0 %v1682, 96
        %v1691 = vpop.permute.xlu0 %1690
        %v1692 = vsel %vm928, %v1687, %v1689
        %v1693 = vsel %vm928, %v1689, %v1691
        %v1697 = vadd.f32 %v1603, %v1692
        %v1698 = vadd.f32 %v1604, %v1693
        %v1699 = vadd.f32 %v1605, %v1691
        %1700 = vset.pattern.permute.xlu0 48
        %1701 = vperm.xlu0 %1700, %v507
        %v1702 = vpop.permute.xlu0 %1701
        %v1704 = vmul.f32 %v1702, %v1560
        %v1705 = vmul.f32 %v1702, %v1561
        %v1706 = vmul.f32 %v1702, %v1562
        %1710 = vrot.lane.b32.xlu0 %v1704, 32
        %v1711 = vpop.permute.xlu0 %1710
        %1712 = vrot.lane.b32.xlu0 %v1705, 32
        %v1713 = vpop.permute.xlu0 %1712
        %1714 = vrot.lane.b32.xlu0 %v1706, 32
        %v1715 = vpop.permute.xlu0 %1714
        %v1716 = vsel %vm880, %v1711, %v1713
        %v1717 = vsel %vm880, %v1713, %v1715
        %v1720 = vadd.f32 %v1626, %v1716
        %v1721 = vadd.f32 %v1627, %v1717
        %1725 = vrot.lane.b32.xlu0 %v1697, 80
        %v1726 = vpop.permute.xlu0 %1725
        %1727 = vrot.lane.b32.xlu0 %v1698, 80
        %v1728 = vpop.permute.xlu0 %1727
        %1729 = vrot.lane.b32.xlu0 %v1699, 80
        %v1730 = vpop.permute.xlu0 %1729
        %vm1731 = vcmask 654336
        %v1732 = vsel %vm1731, %v1726, %v1728
        %v1733 = vsel %vm1731, %v1728, %v1730
        %v1736 = vadd.f32 %v1720, %v1732
        %v1737 = vadd.f32 %v1721, %v1733
        %1741 = vrot.lane.b32.xlu0 %v1673, 96
        %v1742 = vpop.permute.xlu0 %1741
        %1743 = vrot.lane.b32.xlu0 %v1674, 96
        %v1744 = vpop.permute.xlu0 %1743
        %1745 = vrot.lane.b32.xlu0 %v1675, 96
        %v1746 = vpop.permute.xlu0 %1745
        %v1747 = vsel %vm928, %v1742, %v1744
        %v1748 = vsel %vm928, %v1744, %v1746
        %v1751 = vadd.f32 %v1736, %v1747
        %v1752 = vadd.f32 %v1737, %v1748
        %1756 = vrot.lane.b32.xlu0 %v1649, 112
        %v1757 = vpop.permute.xlu0 %1756
        %1758 = vrot.lane.b32.xlu0 %v1650, 112
        %v1759 = vpop.permute.xlu0 %1758
        %1760 = vrot.lane.b32.xlu0 %v1651, 112
        %v1761 = vpop.permute.xlu0 %1760
        %v1762 = vsel %vm710, %v1757, %v1759
        %v1763 = vsel %vm710, %v1759, %v1761
        %v1766 = vadd.f32 %v1751, %v1762
        %v1767 = vadd.f32 %v1752, %v1763
        %v1770 = vrot.slane %v1766, 1
        %v1771 = vrot.slane %v1767, 1
        %v1774 = vadd.f32 %v1766, %v1770
        %v1775 = vadd.f32 %v1767, %v1771
        %v1776 = vsub.f32 0.0, %v1774
        %v1777 = vsub.f32 0.0, %v1775
        %v1778 = vmul.f32 %v1776, 1.442695
        %v1779 = vpow.pop %v1778
        %v1780 = vmul.f32 %v1777, 1.442695
        %v1781 = vpow.pop %v1780
        %v1782 = vadd.f32 %v1779, 1.0
        %v1783 = vadd.f32 %v1781, 1.0
        %v1784 = vrcp.pop %v1782
        %v1785 = vrcp.pop %v1783
        %v1786 = vlaneseq
        %v1787 = vshrl.u32 %v1786, 7
        %v1788 = vsub.s32 0, %v1787
        %v1789 = vrot.slane %v1784, %v1788
        %v1790 = vlaneseq
        %v1791 = vshrl.u32 %v1790, 7
        %v1792 = vsub.s32 0, %v1791
        %v1793 = vrot.slane %v1785, %v1792
        %v1794 = vmul.f32 %v405, %v1789
        %v1795 = vmul.f32 %v406, %v1793
        %v1796 = vmul.f32 %v407, %v1789
        %v1797 = vmul.f32 %v408, %v1793
        %v1798 = vmul.f32 %v409, %v1789
        %v1799 = vmul.f32 %v410, %v1793
        %v1800 = vmul.f32 %v411, %v1789
        %v1801 = vmul.f32 %v412, %v1793
        %1802 = vst [vmem:[%s215] sm:$0xff] %v1794
        %1803 = vst [vmem:[%s215 + $0x8] sm:$0xff] %v1795
        %1804 = vst [vmem:[%s215 + $0x10] sm:$0xff] %v1796
        %1805 = vst [vmem:[%s215 + $0x18] sm:$0xff] %v1797
        %1806 = vst [vmem:[%s215 + $0x20] sm:$0xff] %v1798
        %1807 = vst [vmem:[%s215 + $0x28] sm:$0xff] %v1799
        %1808 = vst [vmem:[%s215 + $0x30] sm:$0xff] %v1800
        %1809 = vst [vmem:[%s215 + $0x38] sm:$0xff] %v1801
        %s1810 = sand.u32 %s118, 1
        %s1811 = scalar_lea.sflag [#allocation4], %s1810
        %s1812 = sand.u32 %s118, 1
        %s1813 = smul.addr %s1812, 64
        %s1814 = scalar_lea.vmem [#allocation5], %s1813
        // Predicated region
        $region41: #{tpu_custom_call.1} parent=35 // pred_check
          %p1815 = pneg %p128
        $region42: #{tpu_custom_call.1} parent=35 // pred_check_branch
          %1817 = sbr.rel (%p1815) target = $region44
        $region43: #{tpu_custom_call.1} parent=35 // pred_region
          %s1819 = ssub.s32 1024, 1024
          %1820 = vsyncadd %s1811, %s1819
          %s1821 = smul.addr %s21, 8
          %s1822 = smul.addr %s1821, 128
          %s1823 = scalar_lea.hbm %s4, %s1822
          %s1824 = sshll.u32 %s1814, 4
          %s1825 = int_to_ptr.vmem [resolvable:$true] %s1824
          %1830 = dma.vmem_to_hbm [thread:$0]  %s1825, 1024, %s1823, %s1811, 256, 256, 16
        $region44: #{tpu_custom_call.1} parent=35 // pred_fallthru
          _
      $region36: #{tpu_custom_call.1} parent=5 // pred_fallthru
        _
      %p1831 = scmp.le.s32.totalorder 2, %s16
      // Predicated region
      $region45: #{tpu_custom_call.1} parent=5 // pred_check
        %p1832 = pneg %p1831
      $region46: #{tpu_custom_call.1} parent=5 // pred_check_branch
        %1834 = sbr.rel (%p1832) target = $region48
      $region47: #{tpu_custom_call.1} parent=5 // pred_region
        %s1835 = ssub.s32 %s16, 2
        // Predicated region
        $region49: #{tpu_custom_call.1} parent=47 // pred_check
          %p1836 = pneg %p134
        $region50: #{tpu_custom_call.1} parent=47 // pred_check_branch
          %1838 = sbr.rel (%p1836) target = $region52
        $region51: #{tpu_custom_call.1} parent=47 // pred_region
          %s1839 = sand.u32 %s119, 1
          %s1840 = scalar_lea.sflag [#allocation4], %s1839
          %s1841 = sand.u32 %s119, 1
          %s1842 = smul.addr %s1841, 64
          %s1843 = scalar_lea.vmem [#allocation5], %s1842
          %1844 = dma.done %s1840, 1024
        $region52: #{tpu_custom_call.1} parent=47 // pred_fallthru
          _
      $region48: #{tpu_custom_call.1} parent=5 // pred_fallthru
        _
    $region6: #{tpu_custom_call.1} parent=1 // loop_footer
      %s20 = sadd.s32 1, %s16
    $region7: #{tpu_custom_call.1} parent=1 // loop_footer_branch
      %15 = sbr.rel target = $region3
    $region8: #{tpu_custom_call.1} parent=1 // loop_exit
      _
    %1845 = vsyncpa [#allocation3], 1
    %s1846 = scalar_lea.sflag [#allocation3], 1
    %1847 = vsyncpa %s1846, 1
    %1848 = vsyncpa [#allocation4], 1
    %s1849 = scalar_lea.sflag [#allocation4], 1
    %1850 = vsyncpa %s1849, 1

</llo_original>
